<compile_context>
chip_gen: v7x
topology: tpu7x:2x2x1
jax: 0.10.0
libtpu: 0.0.40
codegen_flags: <defaults>
</compile_context>

<pallas_src>
import jax
import jax.numpy as jnp
from jax.experimental import pallas as pl
from jax.experimental.pallas import tpu as pltpu


def _resnet_block_kernel(x_ref, w1_ref, b1_ref, w2_ref, b2_ref, o_ref):
    # x_ref block: (1, C, TS) slab of the (N, C, S) activations, channels on
    # sublanes, spatial on lanes (lane-dense, TS % 128 == 0).
    x = x_ref[0].astype(jnp.float32)                       # (C, TS)

    # conv_1 (1x1x1) == W1 @ x + b1
    h = jnp.dot(w1_ref[...], x, preferred_element_type=jnp.float32) + b1_ref[...]
    h = jnp.where(h > 0, h, 0.01 * h)                      # leaky_relu, slope 0.01

    # conv_2 (1x1x1) == W2 @ h + b2
    y = jnp.dot(w2_ref[...], h, preferred_element_type=jnp.float32) + b2_ref[...]

    # residual add + leaky_relu
    y = y + x
    y = jnp.where(y > 0, y, 0.01 * y)

    o_ref[0] = y.astype(o_ref.dtype)


def resnet_block_pallas(x_ncdhw, w1, b1, w2, b2, *, tile_s=2048):
    """x_ncdhw: (N, C, D, H, W).  w1, w2: (C_out, C_in) squeezed 1x1x1 conv weights."""
    N, C, D, H, W = x_ncdhw.shape
    S = D * H * W

    # Free reshape (no data movement) -- stays channels-first.
    x3 = x_ncdhw.reshape(N, C, S)

    # Lane-dense spatial tile: multiple of 128, big enough to amortize the
    # ~0.35us per-grid-step overhead, small enough (C * ts * 4B) to be cheap
    # in VMEM even with double buffering on v7x.
    ts = max(128, min(int(tile_s), pl.cdiv(S, 128) * 128))
    S_pad = pl.cdiv(S, ts) * ts
    if S_pad != S:
        # Pad one partial tile instead of constraining valid input shapes.
        x3 = jnp.pad(x3, ((0, 0), (0, 0), (0, S_pad - S)))

    w1f = jnp.asarray(w1, jnp.float32)            # (C_out, C_in), lhs of W @ X
    w2f = jnp.asarray(w2, jnp.float32)
    b1c = jnp.asarray(b1, jnp.float32).reshape(C, 1)
    b2c = jnp.asarray(b2, jnp.float32).reshape(C, 1)

    grid = (N, S_pad // ts)
    out3 = pl.pallas_call(
        _resnet_block_kernel,
        out_shape=jax.ShapeDtypeStruct((N, C, S_pad), x3.dtype),
        grid_spec=pltpu.PrefetchScalarGridSpec(
            num_scalar_prefetch=0,
            grid=grid,
            in_specs=[
                pl.BlockSpec((1, C, ts), lambda n, j: (n, 0, j)),  # x slab
                pl.BlockSpec((C, C), lambda n, j: (0, 0)),         # W1 (resident)
                pl.BlockSpec((C, 1), lambda n, j: (0, 0)),         # b1 (resident)
                pl.BlockSpec((C, C), lambda n, j: (0, 0)),         # W2 (resident)
                pl.BlockSpec((C, 1), lambda n, j: (0, 0)),         # b2 (resident)
            ],
            out_specs=pl.BlockSpec((1, C, ts), lambda n, j: (n, 0, j)),
        ),
        compiler_params=pltpu.CompilerParams(
            dimension_semantics=("parallel", "parallel"),
        ),
    )(x3, w1f, b1c, w2f, b2c)

    if S_pad != S:
        out3 = out3[:, :, :S]
    return out3.reshape(N, C, D, H, W)


def resnet_block_ref(x, w1, b1, w2, b2):
    """Pure-JAX reference matching the PyTorch forward (NCDHW)."""
    def conv1x1(inp, w, b):
        y = jnp.einsum("ncdhw,oc->nodhw", inp, w)
        return y + b[None, :, None, None, None]

    def lrelu(v):
        return jnp.where(v > 0, v, 0.01 * v)

    h = lrelu(conv1x1(x, w1, b1))
    y = conv1x1(h, w2, b2) + x
    return lrelu(y)


if __name__ == "__main__":
    ef_dim = 32
    N, D, H, W = 2, 16, 16, 16   # S = 4096 -> ts = 2048 -> grid (2, 2)

    key = jax.random.PRNGKey(0)
    kx, kw1, kb1, kw2, kb2 = jax.random.split(key, 5)

    x = jax.random.normal(kx, (N, ef_dim, D, H, W), dtype=jnp.float32)
    # Conv3d(ef_dim, ef_dim, 1) weights are (ef_dim, ef_dim, 1, 1, 1); store squeezed.
    w1 = jax.random.normal(kw1, (ef_dim, ef_dim), dtype=jnp.float32) * 0.1
    b1 = jax.random.normal(kb1, (ef_dim,), dtype=jnp.float32) * 0.1
    w2 = jax.random.normal(kw2, (ef_dim, ef_dim), dtype=jnp.float32) * 0.1
    b2 = jax.random.normal(kb2, (ef_dim,), dtype=jnp.float32) * 0.1

    out = resnet_block_pallas(x, w1, b1, w2, b2)
    out = jax.block_until_ready(out)

    ref = resnet_block_ref(x, w1, b1, w2, b2)
    assert out.shape == x.shape
    assert jnp.allclose(out, ref, atol=1e-4, rtol=1e-4), "mismatch vs reference"

    print("KERNEL_OK")
</pallas_src>

<mosaic_0001>
module attributes {stable_mosaic.version = 11 : i64} {
  func.func @_resnet_block_kernel(%arg0: i32, %arg1: i32, %arg2: memref<1x32x2048xf32, #tpu.memory_space<vmem>>, %arg3: memref<32x32xf32, #tpu.memory_space<vmem>>, %arg4: memref<32x1xf32, #tpu.memory_space<vmem>>, %arg5: memref<32x32xf32, #tpu.memory_space<vmem>>, %arg6: memref<32x1xf32, #tpu.memory_space<vmem>>, %arg7: memref<1x32x2048xf32, #tpu.memory_space<vmem>>) attributes {dimension_semantics = [#tpu.dimension_semantics<parallel>, #tpu.dimension_semantics<parallel>], iteration_bounds = array<i64: 2, 2>, scalar_prefetch = 0 : i64, scratch_operands = 0 : i64, tpu.core_type = #tpu.core_type<tc>, window_params = [{transform_indices = @transform_0, window_bounds = array<i64: 1, 32, 2048>}, {pipeline_mode = #tpu.pipeline_mode<synchronous>, transform_indices = @transform_1, window_bounds = array<i64: 32, 32>}, {pipeline_mode = #tpu.pipeline_mode<synchronous>, transform_indices = @transform_2, window_bounds = array<i64: 32, 1>}, {pipeline_mode = #tpu.pipeline_mode<synchronous>, transform_indices = @transform_3, window_bounds = array<i64: 32, 32>}, {pipeline_mode = #tpu.pipeline_mode<synchronous>, transform_indices = @transform_4, window_bounds = array<i64: 32, 1>}, {transform_indices = @transform_5, window_bounds = array<i64: 1, 32, 2048>}]} {
    %c0 = arith.constant 0 : index
    %c0_0 = arith.constant 0 : index
    %c0_1 = arith.constant 0 : index
    %0 = vector.load %arg2[%c0, %c0_0, %c0_1] : memref<1x32x2048xf32, #tpu.memory_space<vmem>>, vector<1x32x2048xf32>
    %1 = vector.shape_cast %0 : vector<1x32x2048xf32> to vector<32x2048xf32>
    %c0_2 = arith.constant 0 : index
    %c0_3 = arith.constant 0 : index
    %2 = vector.load %arg3[%c0_2, %c0_3] : memref<32x32xf32, #tpu.memory_space<vmem>>, vector<32x32xf32>
    %cst = arith.constant dense<0.000000e+00> : vector<32x2048xf32>
    %3 = tpu.matmul %2, %1, %cst {dimension_numbers = #tpu.dot_dimension_numbers<[1], [0], [0], [1], [0, 0, 1, 1], [], []>} : vector<32x32xf32>, vector<32x2048xf32>, vector<32x2048xf32> -> vector<32x2048xf32>
    %c0_4 = arith.constant 0 : index
    %c0_5 = arith.constant 0 : index
    %4 = vector.load %arg4[%c0_4, %c0_5] : memref<32x1xf32, #tpu.memory_space<vmem>>, vector<32x1xf32>
    %5 = vector.broadcast %4 : vector<32x1xf32> to vector<32x2048xf32>
    %6 = arith.addf %3, %5 : vector<32x2048xf32>
    %cst_6 = arith.constant 0.000000e+00 : f32
    %7 = vector.broadcast %cst_6 : f32 to vector<32x2048xf32>
    %8 = arith.cmpf ogt, %6, %7 : vector<32x2048xf32>
    %cst_7 = arith.constant 0.00999999977 : f32
    %9 = vector.broadcast %cst_7 : f32 to vector<32x2048xf32>
    %10 = arith.mulf %9, %6 : vector<32x2048xf32>
    %11 = arith.select %8, %6, %10 : vector<32x2048xi1>, vector<32x2048xf32>
    %c0_8 = arith.constant 0 : index
    %c0_9 = arith.constant 0 : index
    %12 = vector.load %arg5[%c0_8, %c0_9] : memref<32x32xf32, #tpu.memory_space<vmem>>, vector<32x32xf32>
    %cst_10 = arith.constant dense<0.000000e+00> : vector<32x2048xf32>
    %13 = tpu.matmul %12, %11, %cst_10 {dimension_numbers = #tpu.dot_dimension_numbers<[1], [0], [0], [1], [0, 0, 1, 1], [], []>} : vector<32x32xf32>, vector<32x2048xf32>, vector<32x2048xf32> -> vector<32x2048xf32>
    %c0_11 = arith.constant 0 : index
    %c0_12 = arith.constant 0 : index
    %14 = vector.load %arg6[%c0_11, %c0_12] : memref<32x1xf32, #tpu.memory_space<vmem>>, vector<32x1xf32>
    %15 = vector.broadcast %14 : vector<32x1xf32> to vector<32x2048xf32>
    %16 = arith.addf %13, %15 : vector<32x2048xf32>
    %17 = arith.addf %16, %1 : vector<32x2048xf32>
    %cst_13 = arith.constant 0.000000e+00 : f32
    %18 = vector.broadcast %cst_13 : f32 to vector<32x2048xf32>
    %19 = arith.cmpf ogt, %17, %18 : vector<32x2048xf32>
    %cst_14 = arith.constant 0.00999999977 : f32
    %20 = vector.broadcast %cst_14 : f32 to vector<32x2048xf32>
    %21 = arith.mulf %20, %17 : vector<32x2048xf32>
    %22 = arith.select %19, %17, %21 : vector<32x2048xi1>, vector<32x2048xf32>
    %c0_15 = arith.constant 0 : index
    %c0_16 = arith.constant 0 : index
    %c0_17 = arith.constant 0 : index
    %23 = vector.load %arg7[%c0_15, %c0_16, %c0_17] : memref<1x32x2048xf32, #tpu.memory_space<vmem>>, vector<1x32x2048xf32>
    %24 = vector.shape_cast %23 : vector<1x32x2048xf32> to vector<32x2048xf32>
    %25 = vector.shape_cast %22 : vector<32x2048xf32> to vector<1x32x2048xf32>
    tpu.vector_store %arg7[%c0_15, %c0_16, %c0_17], %25 {strides = array<i32>} : memref<1x32x2048xf32, #tpu.memory_space<vmem>>, vector<1x32x2048xf32>,
    return
  }
  func.func @transform_0(%arg0: i32, %arg1: i32) -> (i32, i32, i32) {
    %c0_i32 = arith.constant 0 : i32
    %c0_i32_0 = arith.constant 0 : i32
    return %arg0, %c0_i32, %arg1 : i32, i32, i32
  }
  func.func @transform_1(%arg0: i32, %arg1: i32) -> (i32, i32) {
    %c0_i32 = arith.constant 0 : i32
    %c0_i32_0 = arith.constant 0 : i32
    %c0_i32_1 = arith.constant 0 : i32
    return %c0_i32, %c0_i32_0 : i32, i32
  }
  func.func @transform_2(%arg0: i32, %arg1: i32) -> (i32, i32) {
    %c0_i32 = arith.constant 0 : i32
    %c0_i32_0 = arith.constant 0 : i32
    %c0_i32_1 = arith.constant 0 : i32
    return %c0_i32, %c0_i32_0 : i32, i32
  }
  func.func @transform_3(%arg0: i32, %arg1: i32) -> (i32, i32) {
    %c0_i32 = arith.constant 0 : i32
    %c0_i32_0 = arith.constant 0 : i32
    %c0_i32_1 = arith.constant 0 : i32
    return %c0_i32, %c0_i32_0 : i32, i32
  }
  func.func @transform_4(%arg0: i32, %arg1: i32) -> (i32, i32) {
    %c0_i32 = arith.constant 0 : i32
    %c0_i32_0 = arith.constant 0 : i32
    %c0_i32_1 = arith.constant 0 : i32
    return %c0_i32, %c0_i32_0 : i32, i32
  }
  func.func @transform_5(%arg0: i32, %arg1: i32) -> (i32, i32, i32) {
    %c0_i32 = arith.constant 0 : i32
    %c0_i32_0 = arith.constant 0 : i32
    return %arg0, %c0_i32, %arg1 : i32, i32, i32
  }
}

</mosaic_0001>

<llo_original>
// kernel: tpu_custom_call.1
$region0: #{tpu_custom_call.1}
  #allocation0 [shape = 'u32[]', space=smem, size = 0x4, offset = 0x4, fixed_abs, tag = 'smem constant byte address 0x4 - core index']
  #allocation1 [shape = 'u32[144,128]{1,0:T(1,128)}', space=vmem, size = 0x12000, scoped, tag = 'internal scratch']
  %s0 = inlined_call_operand.hbm [shape: f32[2,32,4096], index: 0, kind: input, shape index: {}]
  %s1 = inlined_call_operand.vmem [shape: f32[32,32], index: 1, kind: input, shape index: {}]
  %s2 = inlined_call_operand.vmem [shape: f32[32,1], index: 2, kind: input, shape index: {}]
  %s3 = inlined_call_operand.vmem [shape: f32[32,32], index: 3, kind: input, shape index: {}]
  %s4 = inlined_call_operand.vmem [shape: f32[32,1], index: 4, kind: input, shape index: {}]
  %s5 = inlined_call_operand.hbm [shape: f32[2,32,4096], index: 5, kind: output, shape index: {}]
  %s6 = sld [smem:[#allocation0]]
  $region57: #{tpu_custom_call.1} parent=0
    _
  %s8 = ssub.s32 1, %s6
  %s9 = scalar_select 0, %s8, %s6
  $region1: #{tpu_custom_call.1} parent=0
    #allocation2 [shape = 'u8[524288]{0}', space=vmem, size = 0x80000, scoped, tag = 'input window, operand 0']
    #allocation3 [shape = 's32[2]{0}', space=sflag, size = 0x8, scoped, tag = 'scoped memory for tpu_custom_call.1']
    #allocation4 [shape = 's32[2]{0}', space=sflag, size = 0x8, scoped, tag = 'scoped memory for tpu_custom_call.1']
    #allocation5 [shape = 'u8[524288]{0}', space=vmem, size = 0x80000, scoped, tag = 'output window, operand 0']
    %10 = vsyncpa [#allocation3], 0
    %s11 = scalar_lea.sflag [#allocation3], 1
    %12 = vsyncpa %s11, 0
    %13 = vsyncpa [#allocation4], 0
    %s14 = scalar_lea.sflag [#allocation4], 1
    %15 = vsyncpa %s14, 0
    loop: start=0, step=1, limit=6
    $region2: #{tpu_custom_call.1} parent=1 // loop_pre_header
      _
    $region3: #{tpu_custom_call.1} parent=1 // loop_header
      %s17 = sphi 0, %s21
      %p18 = scmp.ge.s32.totalorder %s17, 6
      %s24 = sphi 0, %s36
      %s25 = sphi 0, %s32
      %s26 = sphi 0, %s24
      %s27 = sphi 0, %s25
      %s28 = sphi 0, %s26
      %s29 = sphi 0, %s27
      %s41 = sphi 0, %s43
      %s44 = sphi 0, %s41
      %s45 = sphi 0, %s44
      %s61 = sphi 0, %s45
      %s65 = sphi 0, %s65
      %s67 = sphi 0, %s65
      %s68 = sphi 0, %s67
      %s82 = sphi 0, %s68
      %s86 = sphi 0, %s86
      %s88 = sphi 0, %s86
      %s89 = sphi 0, %s88
      %s103 = sphi 0, %s89
      %s107 = sphi 0, %s107
      %s109 = sphi 0, %s107
      %s110 = sphi 0, %s109
      %s124 = sphi 0, %s110
      %s128 = sphi 0, %s128
      %s130 = sphi 0, %s128
      %s131 = sphi 0, %s130
      %s145 = sphi 0, %s131
      %s153 = sphi 0, %s155
      %s156 = sphi 0, %s153
      %s157 = sphi 0, %s156
      %s173 = sphi 0, %s157
    $region4: #{tpu_custom_call.1} parent=1 // loop_header_branch
      %20 = sbr.rel (%p18) target = $region8
    $region5: #{tpu_custom_call.1} parent=1 // loop_body
      %s22 = ssub.s32 %s17, 1
      %s23 = ssub.s32 %s17, 2
      %s30 = sadd.s32 1, %s25
      %p31 = scmp.ge.s32.totalorder %s30, 2
      %s32 = scalar_select %p31, 0, %s30
      %s33 = sadd.s32 1, %s24
      %s34 = scalar_select %p31, %s33, %s24
      %p35 = scmp.ge.s32.totalorder %s34, 2
      %s36 = scalar_select %p35, 0, %s34
      %s37 = ssub.s32 %s24, %s36
      %s38 = ssub.s32 %s25, %s32
      %s39 = sor.u32 %s37, %s38
      %p40 = scmp.eq.s32.totalorder %s39, 0
      %s42 = sadd.s32 %s41, 1
      %s43 = scalar_select %p40, %s41, %s42
      %p46 = pneg %p40
      %p47 = scmp.eq.s32.totalorder %s17, 3
      %p48 = por %p46, %p47
      %p49 = scmp.ne.s32.totalorder %s41, %s44
      %p50 = scmp.eq.s32.totalorder %s17, 0
      %p51 = por %p49, %p50
      %p52 = scmp.ne.s32.totalorder %s41, %s44
      %p53 = scmp.eq.s32.totalorder %s22, 3
      %p54 = por %p52, %p53
      %p55 = scmp.ne.s32.totalorder %s44, %s45
      %p56 = scmp.eq.s32.totalorder %s22, 0
      %p57 = por %p55, %p56
      %p58 = scmp.ne.s32.totalorder %s44, %s45
      %p59 = scmp.eq.s32.totalorder %s23, 3
      %p60 = por %p58, %p59
      %p62 = scmp.ne.s32.totalorder %s45, %s61
      %p63 = scmp.eq.s32.totalorder %s23, 0
      %p64 = por %p62, %p63
      %s66 = sadd.s32 %s65, 1
      %p69 = scmp.eq.s32.totalorder %s17, 3
      %p70 = scmp.ne.s32.totalorder %s65, %s67
      %p71 = scmp.eq.s32.totalorder %s17, 0
      %p72 = por %p70, %p71
      %p73 = scmp.ne.s32.totalorder %s65, %s67
      %p74 = scmp.eq.s32.totalorder %s22, 3
      %p75 = por %p73, %p74
      %p76 = scmp.ne.s32.totalorder %s67, %s68
      %p77 = scmp.eq.s32.totalorder %s22, 0
      %p78 = por %p76, %p77
      %p79 = scmp.ne.s32.totalorder %s67, %s68
      %p80 = scmp.eq.s32.totalorder %s23, 3
      %p81 = por %p79, %p80
      %p83 = scmp.ne.s32.totalorder %s68, %s82
      %p84 = scmp.eq.s32.totalorder %s23, 0
      %p85 = por %p83, %p84
      %s87 = sadd.s32 %s86, 1
      %p90 = scmp.eq.s32.totalorder %s17, 3
      %p91 = scmp.ne.s32.totalorder %s86, %s88
      %p92 = scmp.eq.s32.totalorder %s17, 0
      %p93 = por %p91, %p92
      %p94 = scmp.ne.s32.totalorder %s86, %s88
      %p95 = scmp.eq.s32.totalorder %s22, 3
      %p96 = por %p94, %p95
      %p97 = scmp.ne.s32.totalorder %s88, %s89
      %p98 = scmp.eq.s32.totalorder %s22, 0
      %p99 = por %p97, %p98
      %p100 = scmp.ne.s32.totalorder %s88, %s89
      %p101 = scmp.eq.s32.totalorder %s23, 3
      %p102 = por %p100, %p101
      %p104 = scmp.ne.s32.totalorder %s89, %s103
      %p105 = scmp.eq.s32.totalorder %s23, 0
      %p106 = por %p104, %p105
      %s108 = sadd.s32 %s107, 1
      %p111 = scmp.eq.s32.totalorder %s17, 3
      %p112 = scmp.ne.s32.totalorder %s107, %s109
      %p113 = scmp.eq.s32.totalorder %s17, 0
      %p114 = por %p112, %p113
      %p115 = scmp.ne.s32.totalorder %s107, %s109
      %p116 = scmp.eq.s32.totalorder %s22, 3
      %p117 = por %p115, %p116
      %p118 = scmp.ne.s32.totalorder %s109, %s110
      %p119 = scmp.eq.s32.totalorder %s22, 0
      %p120 = por %p118, %p119
      %p121 = scmp.ne.s32.totalorder %s109, %s110
      %p122 = scmp.eq.s32.totalorder %s23, 3
      %p123 = por %p121, %p122
      %p125 = scmp.ne.s32.totalorder %s110, %s124
      %p126 = scmp.eq.s32.totalorder %s23, 0
      %p127 = por %p125, %p126
      %s129 = sadd.s32 %s128, 1
      %p132 = scmp.eq.s32.totalorder %s17, 3
      %p133 = scmp.ne.s32.totalorder %s128, %s130
      %p134 = scmp.eq.s32.totalorder %s17, 0
      %p135 = por %p133, %p134
      %p136 = scmp.ne.s32.totalorder %s128, %s130
      %p137 = scmp.eq.s32.totalorder %s22, 3
      %p138 = por %p136, %p137
      %p139 = scmp.ne.s32.totalorder %s130, %s131
      %p140 = scmp.eq.s32.totalorder %s22, 0
      %p141 = por %p139, %p140
      %p142 = scmp.ne.s32.totalorder %s130, %s131
      %p143 = scmp.eq.s32.totalorder %s23, 3
      %p144 = por %p142, %p143
      %p146 = scmp.ne.s32.totalorder %s131, %s145
      %p147 = scmp.eq.s32.totalorder %s23, 0
      %p148 = por %p146, %p147
      %s149 = ssub.s32 %s24, %s36
      %s150 = ssub.s32 %s25, %s32
      %s151 = sor.u32 %s149, %s150
      %p152 = scmp.eq.s32.totalorder %s151, 0
      %s154 = sadd.s32 %s153, 1
      %s155 = scalar_select %p152, %s153, %s154
      %p158 = pneg %p152
      %p159 = scmp.eq.s32.totalorder %s17, 3
      %p160 = por %p158, %p159
      %p161 = scmp.ne.s32.totalorder %s153, %s156
      %p162 = scmp.eq.s32.totalorder %s17, 0
      %p163 = por %p161, %p162
      %p164 = scmp.ne.s32.totalorder %s153, %s156
      %p165 = scmp.eq.s32.totalorder %s22, 3
      %p166 = por %p164, %p165
      %p167 = scmp.ne.s32.totalorder %s156, %s157
      %p168 = scmp.eq.s32.totalorder %s22, 0
      %p169 = por %p167, %p168
      %p170 = scmp.ne.s32.totalorder %s156, %s157
      %p171 = scmp.eq.s32.totalorder %s23, 3
      %p172 = por %p170, %p171
      %p174 = scmp.ne.s32.totalorder %s157, %s173
      %p175 = scmp.eq.s32.totalorder %s23, 0
      %p176 = por %p174, %p175
      %p177 = scmp.le.s32.totalorder 1, %s17
      %p178 = scmp.lt.s32.totalorder %s17, 5
      %p179 = pnand %p177, %p178
      %p180 = pneg %p179
      // Predicated region
      $region9: #{tpu_custom_call.1} parent=5 // pred_check
        _
      $region10: #{tpu_custom_call.1} parent=5 // pred_check_branch
        %182 = sbr.rel (%p179) target = $region12
      $region11: #{tpu_custom_call.1} parent=5 // pred_region
        %s183 = ssub.s32 %s17, 1
        // Predicated region
        $region13: #{tpu_custom_call.1} parent=11 // pred_check
          %p184 = pneg %p78
        $region14: #{tpu_custom_call.1} parent=11 // pred_check_branch
          %186 = sbr.rel (%p184) target = $region16
        $region15: #{tpu_custom_call.1} parent=11 // pred_region
          _
        $region16: #{tpu_custom_call.1} parent=11 // pred_fallthru
          _
        // Predicated region
        $region17: #{tpu_custom_call.1} parent=11 // pred_check
          %p187 = pneg %p99
        $region18: #{tpu_custom_call.1} parent=11 // pred_check_branch
          %189 = sbr.rel (%p187) target = $region20
        $region19: #{tpu_custom_call.1} parent=11 // pred_region
          _
        $region20: #{tpu_custom_call.1} parent=11 // pred_fallthru
          _
        // Predicated region
        $region21: #{tpu_custom_call.1} parent=11 // pred_check
          %p190 = pneg %p120
        $region22: #{tpu_custom_call.1} parent=11 // pred_check_branch
          %192 = sbr.rel (%p190) target = $region24
        $region23: #{tpu_custom_call.1} parent=11 // pred_region
          _
        $region24: #{tpu_custom_call.1} parent=11 // pred_fallthru
          _
        // Predicated region
        $region25: #{tpu_custom_call.1} parent=11 // pred_check
          %p193 = pneg %p141
        $region26: #{tpu_custom_call.1} parent=11 // pred_check_branch
          %195 = sbr.rel (%p193) target = $region28
        $region27: #{tpu_custom_call.1} parent=11 // pred_region
          _
        $region28: #{tpu_custom_call.1} parent=11 // pred_fallthru
          _
      $region12: #{tpu_custom_call.1} parent=5 // pred_fallthru
        _
      %p196 = scmp.lt.s32.totalorder %s17, 4
      // Predicated region
      $region29: #{tpu_custom_call.1} parent=5 // pred_check
        %p197 = pneg %p196
      $region30: #{tpu_custom_call.1} parent=5 // pred_check_branch
        %199 = sbr.rel (%p197) target = $region32
      $region31: #{tpu_custom_call.1} parent=5 // pred_region
        // Predicated region
        $region33: #{tpu_custom_call.1} parent=31 // pred_check
          %p200 = pneg %p51
        $region34: #{tpu_custom_call.1} parent=31 // pred_check_branch
          %202 = sbr.rel (%p200) target = $region36
        $region35: #{tpu_custom_call.1} parent=31 // pred_region
          %s203 = sand.u32 %s41, 1
          %s204 = scalar_lea.sflag [#allocation3], %s203
          %s205 = sand.u32 %s41, 1
          %s206 = smul.addr %s205, 512
          %s207 = scalar_lea.vmem [#allocation2], %s206
          %s208 = smul.u32 16, %s25
          %s210 = ssub.s32 8192, 8192
          %211 = vsyncadd %s204, %s210
          %s212 = smul.addr %s24, 128
          %s213 = sadd.s32 %s208, %s212
          %s214 = smul.addr %s213, 128
          %s215 = scalar_lea.hbm %s0, %s214
          %s216 = sshll.u32 %s207, 4
          %s217 = int_to_ptr.vmem [resolvable:$true] %s216
          %222 = dma.hbm_to_vmem [thread:$0]  %s215, 8192, %s217, %s204, 4096, 2048, 128
        $region36: #{tpu_custom_call.1} parent=31 // pred_fallthru
          _
      $region32: #{tpu_custom_call.1} parent=5 // pred_fallthru
        _
      %p223 = scmp.le.s32.totalorder 1, %s17
      %p224 = scmp.lt.s32.totalorder %s17, 5
      %p225 = pnand %p223, %p224
      %p226 = pneg %p225
      // Predicated region
      $region37: #{tpu_custom_call.1} parent=5 // pred_check
        _
      $region38: #{tpu_custom_call.1} parent=5 // pred_check_branch
        %228 = sbr.rel (%p225) target = $region40
      $region39: #{tpu_custom_call.1} parent=5 // pred_region
        %s229 = ssub.s32 %s17, 1
        %s230 = sand.u32 %s44, 1
        %s231 = scalar_lea.sflag [#allocation3], %s230
        %s232 = sand.u32 %s44, 1
        %s233 = smul.addr %s232, 512
        %s234 = scalar_lea.vmem [#allocation2], %s233
        // Predicated region
        $region41: #{tpu_custom_call.1} parent=39 // pred_check
          %p235 = pneg %p57
        $region42: #{tpu_custom_call.1} parent=39 // pred_check_branch
          %237 = sbr.rel (%p235) target = $region44
        $region43: #{tpu_custom_call.1} parent=39 // pred_region
          %238 = dma.done %s231, 8192
        $region44: #{tpu_custom_call.1} parent=39 // pred_fallthru
          _
        %s239 = sand.u32 %s44, 1
        %s240 = scalar_lea.sflag [#allocation3], %s239
        %s241 = sand.u32 %s44, 1
        %s242 = smul.addr %s241, 512
        %s243 = scalar_lea.vmem [#allocation2], %s242
        %p244 = pneg %p57
        %p245 = pneg %p54
        %p246 = pneg %p78
        %p247 = pneg %p75
        %p248 = pneg %p99
        %p249 = pneg %p96
        %p250 = pneg %p120
        %p251 = pneg %p117
        %p252 = pneg %p141
        %p253 = pneg %p138
        %p254 = pneg %p169
        %p255 = pneg %p166
        %s256 = sand.u32 %s156, 1
        %s257 = scalar_lea.sflag [#allocation4], %s256
        %s258 = sand.u32 %s156, 1
        %s259 = smul.addr %s258, 512
        %s260 = scalar_lea.vmem [#allocation5], %s259
        %s261 = smul.u32 16, %s27
        %s262 = smul.u32 16, %s27
        %v263 = vld [vmem:[%s234] sm:$0xff]
        %v264 = vld [vmem:[%s234 + $0x8] sm:$0xff]
        %v265 = vld [vmem:[%s234 + $0x10] sm:$0xff]
        %v266 = vld [vmem:[%s234 + $0x18] sm:$0xff]
        %v267 = vld [vmem:[%s234 + $0x20] sm:$0xff]
        %v268 = vld [vmem:[%s234 + $0x28] sm:$0xff]
        %v269 = vld [vmem:[%s234 + $0x30] sm:$0xff]
        %v270 = vld [vmem:[%s234 + $0x38] sm:$0xff]
        %v271 = vld [vmem:[%s234 + $0x40] sm:$0xff]
        %v272 = vld [vmem:[%s234 + $0x48] sm:$0xff]
        %v273 = vld [vmem:[%s234 + $0x50] sm:$0xff]
        %v274 = vld [vmem:[%s234 + $0x58] sm:$0xff]
        %v275 = vld [vmem:[%s234 + $0x60] sm:$0xff]
        %v276 = vld [vmem:[%s234 + $0x68] sm:$0xff]
        %v277 = vld [vmem:[%s234 + $0x70] sm:$0xff]
        %v278 = vld [vmem:[%s234 + $0x78] sm:$0xff]
        %v279 = vld [vmem:[%s234 + $0x80] sm:$0xff]
        %v280 = vld [vmem:[%s234 + $0x88] sm:$0xff]
        %v281 = vld [vmem:[%s234 + $0x90] sm:$0xff]
        %v282 = vld [vmem:[%s234 + $0x98] sm:$0xff]
        %v283 = vld [vmem:[%s234 + $0xa0] sm:$0xff]
        %v284 = vld [vmem:[%s234 + $0xa8] sm:$0xff]
        %v285 = vld [vmem:[%s234 + $0xb0] sm:$0xff]
        %v286 = vld [vmem:[%s234 + $0xb8] sm:$0xff]
        %v287 = vld [vmem:[%s234 + $0xc0] sm:$0xff]
        %v288 = vld [vmem:[%s234 + $0xc8] sm:$0xff]
        %v289 = vld [vmem:[%s234 + $0xd0] sm:$0xff]
        %v290 = vld [vmem:[%s234 + $0xd8] sm:$0xff]
        %v291 = vld [vmem:[%s234 + $0xe0] sm:$0xff]
        %v292 = vld [vmem:[%s234 + $0xe8] sm:$0xff]
        %v293 = vld [vmem:[%s234 + $0xf0] sm:$0xff]
        %v294 = vld [vmem:[%s234 + $0xf8] sm:$0xff]
        %v295 = vld [vmem:[%s234 + $0x100] sm:$0xff]
        %v296 = vld [vmem:[%s234 + $0x108] sm:$0xff]
        %v297 = vld [vmem:[%s234 + $0x110] sm:$0xff]
        %v298 = vld [vmem:[%s234 + $0x118] sm:$0xff]
        %v299 = vld [vmem:[%s234 + $0x120] sm:$0xff]
        %v300 = vld [vmem:[%s234 + $0x128] sm:$0xff]
        %v301 = vld [vmem:[%s234 + $0x130] sm:$0xff]
        %v302 = vld [vmem:[%s234 + $0x138] sm:$0xff]
        %v303 = vld [vmem:[%s234 + $0x140] sm:$0xff]
        %v304 = vld [vmem:[%s234 + $0x148] sm:$0xff]
        %v305 = vld [vmem:[%s234 + $0x150] sm:$0xff]
        %v306 = vld [vmem:[%s234 + $0x158] sm:$0xff]
        %v307 = vld [vmem:[%s234 + $0x160] sm:$0xff]
        %v308 = vld [vmem:[%s234 + $0x168] sm:$0xff]
        %v309 = vld [vmem:[%s234 + $0x170] sm:$0xff]
        %v310 = vld [vmem:[%s234 + $0x178] sm:$0xff]
        %v311 = vld [vmem:[%s234 + $0x180] sm:$0xff]
        %v312 = vld [vmem:[%s234 + $0x188] sm:$0xff]
        %v313 = vld [vmem:[%s234 + $0x190] sm:$0xff]
        %v314 = vld [vmem:[%s234 + $0x198] sm:$0xff]
        %v315 = vld [vmem:[%s234 + $0x1a0] sm:$0xff]
        %v316 = vld [vmem:[%s234 + $0x1a8] sm:$0xff]
        %v317 = vld [vmem:[%s234 + $0x1b0] sm:$0xff]
        %v318 = vld [vmem:[%s234 + $0x1b8] sm:$0xff]
        %v319 = vld [vmem:[%s234 + $0x1c0] sm:$0xff]
        %v320 = vld [vmem:[%s234 + $0x1c8] sm:$0xff]
        %v321 = vld [vmem:[%s234 + $0x1d0] sm:$0xff]
        %v322 = vld [vmem:[%s234 + $0x1d8] sm:$0xff]
        %v323 = vld [vmem:[%s234 + $0x1e0] sm:$0xff]
        %v324 = vld [vmem:[%s234 + $0x1e8] sm:$0xff]
        %v325 = vld [vmem:[%s234 + $0x1f0] sm:$0xff]
        %v326 = vld [vmem:[%s234 + $0x1f8] sm:$0xff]
        %v327 = vld [vmem:[%s1] sm:$0xff]
        %v328 = vld [vmem:[%s1 + $0x8] sm:$0xff]
        %v329 = vld [vmem:[%s1 + $0x10] sm:$0xff]
        %v330 = vld [vmem:[%s1 + $0x18] sm:$0xff]
        %v331 = vld [vmem:[%s2] sm:$0xff]
        %v332 = vld [vmem:[%s2 + $0x8] sm:$0xff]
        %v333 = vld [vmem:[%s2 + $0x10] sm:$0xff]
        %v334 = vld [vmem:[%s2 + $0x18] sm:$0xff]
        %336 = vset.pattern.permute.xlu0 0
        %337 = vperm.xlu0 %336, %v331
        %v338 = vpop.permute.xlu0 %337
        %341 = vset.pattern.permute.xlu0 0
        %342 = vperm.xlu0 %341, %v332
        %v343 = vpop.permute.xlu0 %342
        %346 = vset.pattern.permute.xlu0 0
        %347 = vperm.xlu0 %346, %v333
        %v348 = vpop.permute.xlu0 %347
        %351 = vset.pattern.permute.xlu0 0
        %352 = vperm.xlu0 %351, %v334
        %v353 = vpop.permute.xlu0 %352
        %vm355 = vcmask 261120
        %v357 = vsel %vm355, %v327, 0
        %v360 = vsel %vm355, %v328, 0
        %v363 = vsel %vm355, %v329, 0
        %v366 = vsel %vm355, %v330, 0
        %368 = vmatprep.subr.mxu0 %v264
        %369 = vmatpush1.msra.mxu0 %v263
        %370 = vmatprep.subr.mxu0 %v280
        %371 = vmatpush1.msra.mxu0 %v279
        %372 = vmatprep.subr.mxu0 %v296
        %373 = vmatpush1.msra.mxu0 %v295
        %374 = vmatprep.subr.mxu0 %v312
        %375 = vmatpush1.msra.mxu0 %v311
        %376 = vmatprep.subr.mxu0 0.0
        %377 = vmatpush1.msra.mxu0 0.0
        %378 = vmatprep.subr.mxu0 0.0
        %379 = vmatpush1.msra.mxu0 0.0
        %380 = vmatprep.subr.mxu0 0.0
        %381 = vmatpush1.msra.mxu0 0.0
        %382 = vmatprep.subr.mxu0 0.0
        %383 = vmatpush1.msra.mxu0 0.0
        %384 = vmatprep.subr.mxu0 0.0
        %385 = vmatpush1.msra.mxu0 0.0
        %386 = vmatprep.subr.mxu0 0.0
        %387 = vmatpush1.msra.mxu0 0.0
        %388 = vmatprep.subr.mxu0 0.0
        %389 = vmatpush1.msra.mxu0 0.0
        %390 = vmatprep.subr.mxu0 0.0
        %391 = vmatpush1.msra.mxu0 0.0
        %392 = vmatprep.subr.mxu0 0.0
        %393 = vmatpush1.msra.mxu0 0.0
        %394 = vmatprep.subr.mxu0 0.0
        %395 = vmatpush1.msra.mxu0 0.0
        %396 = vmatprep.subr.mxu0 0.0
        %397 = vmatpush1.msra.mxu0 0.0
        %398 = vmatprep.subr.mxu0 0.0
        %399 = vmatpush1.msra.mxu0 0.0
        %400 = vmatprep.subr.mxu0 0.0
        %401 = vmatpush1.msra.mxu0 0.0
        %402 = vmatprep.subr.mxu0 0.0
        %403 = vmatpush1.msra.mxu0 0.0
        %404 = vmatprep.subr.mxu0 0.0
        %405 = vmatpush1.msra.mxu0 0.0
        %406 = vmatprep.subr.mxu0 0.0
        %407 = vmatpush1.msra.mxu0 0.0
        %408 = vmatprep.subr.mxu0 0.0
        %409 = vmatpush1.msra.mxu0 0.0
        %410 = vmatprep.subr.mxu0 0.0
        %411 = vmatpush1.msra.mxu0 0.0
        %412 = vmatprep.subr.mxu0 0.0
        %413 = vmatpush1.msra.mxu0 0.0
        %414 = vmatprep.subr.mxu0 0.0
        %415 = vmatpush1.msra.mxu0 0.0
        %416 = vmatprep.subr.mxu0 0.0
        %417 = vmatpush1.msra.mxu0 0.0
        %418 = vmatprep.subr.mxu0 0.0
        %419 = vmatpush1.msra.mxu0 0.0
        %420 = vmatprep.subr.mxu0 0.0
        %421 = vmatpush1.msra.mxu0 0.0
        %422 = vmatprep.subr.mxu0 0.0
        %423 = vmatpush1.msra.mxu0 0.0
        %424 = vmatprep.subr.mxu0 0.0
        %425 = vmatpush1.msra.mxu0 0.0
        %426 = vmatprep.subr.mxu0 0.0
        %427 = vmatpush1.msra.mxu0 0.0
        %428 = vmatprep.subr.mxu0 0.0
        %429 = vmatpush1.msra.mxu0 0.0
        %430 = vmatprep.subr.mxu0 0.0
        %431 = vmatpush1.msra.mxu0 0.0
        %432 = vmatprep.mubr.f32.mxu0 0.0
        %433 = vmatmul.mubr.f32.gmra.mrb[0].mxu0 %v357
        %v434 = vpop.f32.mrb[0].mxu0
        %v435 = vadd.f32 %v338, %v434
        %v436 = vpop.f32.mrb[0].mxu0
        %v437 = vadd.f32 %v338, %v436
        %438 = vmatprep.mubr.f32.mxu0 0.0
        %439 = vmatmul.mubr.f32.gmra.mrb[0].mxu0 %v360
        %v440 = vpop.f32.mrb[0].mxu0
        %v441 = vadd.f32 %v343, %v440
        %v442 = vpop.f32.mrb[0].mxu0
        %v443 = vadd.f32 %v343, %v442
        %444 = vmatprep.mubr.f32.mxu0 0.0
        %445 = vmatmul.mubr.f32.gmra.mrb[0].mxu0 %v363
        %v446 = vpop.f32.mrb[0].mxu0
        %v447 = vadd.f32 %v348, %v446
        %v448 = vpop.f32.mrb[0].mxu0
        %v449 = vadd.f32 %v348, %v448
        %450 = vmatprep.mubr.f32.mxu0 0.0
        %451 = vmatmul.mubr.f32.gmra.mrb[0].mxu0 %v366
        %v452 = vpop.f32.mrb[0].mxu0
        %v453 = vadd.f32 %v353, %v452
        %v454 = vpop.f32.mrb[0].mxu0
        %v455 = vadd.f32 %v353, %v454
        %456 = vdwg.mxu0
        %457 = vmatprep.subr.mxu0 %v266
        %458 = vmatpush1.msra.mxu0 %v265
        %459 = vmatprep.subr.mxu0 %v282
        %460 = vmatpush1.msra.mxu0 %v281
        %461 = vmatprep.subr.mxu0 %v298
        %462 = vmatpush1.msra.mxu0 %v297
        %463 = vmatprep.subr.mxu0 %v314
        %464 = vmatpush1.msra.mxu0 %v313
        %465 = vmatprep.subr.mxu0 0.0
        %466 = vmatpush1.msra.mxu0 0.0
        %467 = vmatprep.subr.mxu0 0.0
        %468 = vmatpush1.msra.mxu0 0.0
        %469 = vmatprep.subr.mxu0 0.0
        %470 = vmatpush1.msra.mxu0 0.0
        %471 = vmatprep.subr.mxu0 0.0
        %472 = vmatpush1.msra.mxu0 0.0
        %473 = vmatprep.subr.mxu0 0.0
        %474 = vmatpush1.msra.mxu0 0.0
        %475 = vmatprep.subr.mxu0 0.0
        %476 = vmatpush1.msra.mxu0 0.0
        %477 = vmatprep.subr.mxu0 0.0
        %478 = vmatpush1.msra.mxu0 0.0
        %479 = vmatprep.subr.mxu0 0.0
        %480 = vmatpush1.msra.mxu0 0.0
        %481 = vmatprep.subr.mxu0 0.0
        %482 = vmatpush1.msra.mxu0 0.0
        %483 = vmatprep.subr.mxu0 0.0
        %484 = vmatpush1.msra.mxu0 0.0
        %485 = vmatprep.subr.mxu0 0.0
        %486 = vmatpush1.msra.mxu0 0.0
        %487 = vmatprep.subr.mxu0 0.0
        %488 = vmatpush1.msra.mxu0 0.0
        %489 = vmatprep.subr.mxu0 0.0
        %490 = vmatpush1.msra.mxu0 0.0
        %491 = vmatprep.subr.mxu0 0.0
        %492 = vmatpush1.msra.mxu0 0.0
        %493 = vmatprep.subr.mxu0 0.0
        %494 = vmatpush1.msra.mxu0 0.0
        %495 = vmatprep.subr.mxu0 0.0
        %496 = vmatpush1.msra.mxu0 0.0
        %497 = vmatprep.subr.mxu0 0.0
        %498 = vmatpush1.msra.mxu0 0.0
        %499 = vmatprep.subr.mxu0 0.0
        %500 = vmatpush1.msra.mxu0 0.0
        %501 = vmatprep.subr.mxu0 0.0
        %502 = vmatpush1.msra.mxu0 0.0
        %503 = vmatprep.subr.mxu0 0.0
        %504 = vmatpush1.msra.mxu0 0.0
        %505 = vmatprep.subr.mxu0 0.0
        %506 = vmatpush1.msra.mxu0 0.0
        %507 = vmatprep.subr.mxu0 0.0
        %508 = vmatpush1.msra.mxu0 0.0
        %509 = vmatprep.subr.mxu0 0.0
        %510 = vmatpush1.msra.mxu0 0.0
        %511 = vmatprep.subr.mxu0 0.0
        %512 = vmatpush1.msra.mxu0 0.0
        %513 = vmatprep.subr.mxu0 0.0
        %514 = vmatpush1.msra.mxu0 0.0
        %515 = vmatprep.subr.mxu0 0.0
        %516 = vmatpush1.msra.mxu0 0.0
        %517 = vmatprep.subr.mxu0 0.0
        %518 = vmatpush1.msra.mxu0 0.0
        %519 = vmatprep.subr.mxu0 0.0
        %520 = vmatpush1.msra.mxu0 0.0
        %521 = vmatprep.mubr.f32.mxu0 0.0
        %522 = vmatmul.mubr.f32.gmra.mrb[0].mxu0 %v357
        %v523 = vpop.f32.mrb[0].mxu0
        %v524 = vadd.f32 %v338, %v523
        %v525 = vpop.f32.mrb[0].mxu0
        %v526 = vadd.f32 %v338, %v525
        %527 = vmatprep.mubr.f32.mxu0 0.0
        %528 = vmatmul.mubr.f32.gmra.mrb[0].mxu0 %v360
        %v529 = vpop.f32.mrb[0].mxu0
        %v530 = vadd.f32 %v343, %v529
        %v531 = vpop.f32.mrb[0].mxu0
        %v532 = vadd.f32 %v343, %v531
        %533 = vmatprep.mubr.f32.mxu0 0.0
        %534 = vmatmul.mubr.f32.gmra.mrb[0].mxu0 %v363
        %v535 = vpop.f32.mrb[0].mxu0
        %v536 = vadd.f32 %v348, %v535
        %v537 = vpop.f32.mrb[0].mxu0
        %v538 = vadd.f32 %v348, %v537
        %539 = vmatprep.mubr.f32.mxu0 0.0
        %540 = vmatmul.mubr.f32.gmra.mrb[0].mxu0 %v366
        %v541 = vpop.f32.mrb[0].mxu0
        %v542 = vadd.f32 %v353, %v541
        %v543 = vpop.f32.mrb[0].mxu0
        %v544 = vadd.f32 %v353, %v543
        %545 = vdwg.mxu0
        %546 = vmatprep.subr.mxu0 %v268
        %547 = vmatpush1.msra.mxu0 %v267
        %548 = vmatprep.subr.mxu0 %v284
        %549 = vmatpush1.msra.mxu0 %v283
        %550 = vmatprep.subr.mxu0 %v300
        %551 = vmatpush1.msra.mxu0 %v299
        %552 = vmatprep.subr.mxu0 %v316
        %553 = vmatpush1.msra.mxu0 %v315
        %554 = vmatprep.subr.mxu0 0.0
        %555 = vmatpush1.msra.mxu0 0.0
        %556 = vmatprep.subr.mxu0 0.0
        %557 = vmatpush1.msra.mxu0 0.0
        %558 = vmatprep.subr.mxu0 0.0
        %559 = vmatpush1.msra.mxu0 0.0
        %560 = vmatprep.subr.mxu0 0.0
        %561 = vmatpush1.msra.mxu0 0.0
        %562 = vmatprep.subr.mxu0 0.0
        %563 = vmatpush1.msra.mxu0 0.0
        %564 = vmatprep.subr.mxu0 0.0
        %565 = vmatpush1.msra.mxu0 0.0
        %566 = vmatprep.subr.mxu0 0.0
        %567 = vmatpush1.msra.mxu0 0.0
        %568 = vmatprep.subr.mxu0 0.0
        %569 = vmatpush1.msra.mxu0 0.0
        %570 = vmatprep.subr.mxu0 0.0
        %571 = vmatpush1.msra.mxu0 0.0
        %572 = vmatprep.subr.mxu0 0.0
        %573 = vmatpush1.msra.mxu0 0.0
        %574 = vmatprep.subr.mxu0 0.0
        %575 = vmatpush1.msra.mxu0 0.0
        %576 = vmatprep.subr.mxu0 0.0
        %577 = vmatpush1.msra.mxu0 0.0
        %578 = vmatprep.subr.mxu0 0.0
        %579 = vmatpush1.msra.mxu0 0.0
        %580 = vmatprep.subr.mxu0 0.0
        %581 = vmatpush1.msra.mxu0 0.0
        %582 = vmatprep.subr.mxu0 0.0
        %583 = vmatpush1.msra.mxu0 0.0
        %584 = vmatprep.subr.mxu0 0.0
        %585 = vmatpush1.msra.mxu0 0.0
        %586 = vmatprep.subr.mxu0 0.0
        %587 = vmatpush1.msra.mxu0 0.0
        %588 = vmatprep.subr.mxu0 0.0
        %589 = vmatpush1.msra.mxu0 0.0
        %590 = vmatprep.subr.mxu0 0.0
        %591 = vmatpush1.msra.mxu0 0.0
        %592 = vmatprep.subr.mxu0 0.0
        %593 = vmatpush1.msra.mxu0 0.0
        %594 = vmatprep.subr.mxu0 0.0
        %595 = vmatpush1.msra.mxu0 0.0
        %596 = vmatprep.subr.mxu0 0.0
        %597 = vmatpush1.msra.mxu0 0.0
        %598 = vmatprep.subr.mxu0 0.0
        %599 = vmatpush1.msra.mxu0 0.0
        %600 = vmatprep.subr.mxu0 0.0
        %601 = vmatpush1.msra.mxu0 0.0
        %602 = vmatprep.subr.mxu0 0.0
        %603 = vmatpush1.msra.mxu0 0.0
        %604 = vmatprep.subr.mxu0 0.0
        %605 = vmatpush1.msra.mxu0 0.0
        %606 = vmatprep.subr.mxu0 0.0
        %607 = vmatpush1.msra.mxu0 0.0
        %608 = vmatprep.subr.mxu0 0.0
        %609 = vmatpush1.msra.mxu0 0.0
        %610 = vmatprep.mubr.f32.mxu0 0.0
        %611 = vmatmul.mubr.f32.gmra.mrb[0].mxu0 %v357
        %v612 = vpop.f32.mrb[0].mxu0
        %v613 = vadd.f32 %v338, %v612
        %v614 = vpop.f32.mrb[0].mxu0
        %v615 = vadd.f32 %v338, %v614
        %616 = vmatprep.mubr.f32.mxu0 0.0
        %617 = vmatmul.mubr.f32.gmra.mrb[0].mxu0 %v360
        %v618 = vpop.f32.mrb[0].mxu0
        %v619 = vadd.f32 %v343, %v618
        %v620 = vpop.f32.mrb[0].mxu0
        %v621 = vadd.f32 %v343, %v620
        %622 = vmatprep.mubr.f32.mxu0 0.0
        %623 = vmatmul.mubr.f32.gmra.mrb[0].mxu0 %v363
        %v624 = vpop.f32.mrb[0].mxu0
        %v625 = vadd.f32 %v348, %v624
        %v626 = vpop.f32.mrb[0].mxu0
        %v627 = vadd.f32 %v348, %v626
        %628 = vmatprep.mubr.f32.mxu0 0.0
        %629 = vmatmul.mubr.f32.gmra.mrb[0].mxu0 %v366
        %v630 = vpop.f32.mrb[0].mxu0
        %v631 = vadd.f32 %v353, %v630
        %v632 = vpop.f32.mrb[0].mxu0
        %v633 = vadd.f32 %v353, %v632
        %634 = vdwg.mxu0
        %635 = vmatprep.subr.mxu0 %v270
        %636 = vmatpush1.msra.mxu0 %v269
        %637 = vmatprep.subr.mxu0 %v286
        %638 = vmatpush1.msra.mxu0 %v285
        %639 = vmatprep.subr.mxu0 %v302
        %640 = vmatpush1.msra.mxu0 %v301
        %641 = vmatprep.subr.mxu0 %v318
        %642 = vmatpush1.msra.mxu0 %v317
        %643 = vmatprep.subr.mxu0 0.0
        %644 = vmatpush1.msra.mxu0 0.0
        %645 = vmatprep.subr.mxu0 0.0
        %646 = vmatpush1.msra.mxu0 0.0
        %647 = vmatprep.subr.mxu0 0.0
        %648 = vmatpush1.msra.mxu0 0.0
        %649 = vmatprep.subr.mxu0 0.0
        %650 = vmatpush1.msra.mxu0 0.0
        %651 = vmatprep.subr.mxu0 0.0
        %652 = vmatpush1.msra.mxu0 0.0
        %653 = vmatprep.subr.mxu0 0.0
        %654 = vmatpush1.msra.mxu0 0.0
        %655 = vmatprep.subr.mxu0 0.0
        %656 = vmatpush1.msra.mxu0 0.0
        %657 = vmatprep.subr.mxu0 0.0
        %658 = vmatpush1.msra.mxu0 0.0
        %659 = vmatprep.subr.mxu0 0.0
        %660 = vmatpush1.msra.mxu0 0.0
        %661 = vmatprep.subr.mxu0 0.0
        %662 = vmatpush1.msra.mxu0 0.0
        %663 = vmatprep.subr.mxu0 0.0
        %664 = vmatpush1.msra.mxu0 0.0
        %665 = vmatprep.subr.mxu0 0.0
        %666 = vmatpush1.msra.mxu0 0.0
        %667 = vmatprep.subr.mxu0 0.0
        %668 = vmatpush1.msra.mxu0 0.0
        %669 = vmatprep.subr.mxu0 0.0
        %670 = vmatpush1.msra.mxu0 0.0
        %671 = vmatprep.subr.mxu0 0.0
        %672 = vmatpush1.msra.mxu0 0.0
        %673 = vmatprep.subr.mxu0 0.0
        %674 = vmatpush1.msra.mxu0 0.0
        %675 = vmatprep.subr.mxu0 0.0
        %676 = vmatpush1.msra.mxu0 0.0
        %677 = vmatprep.subr.mxu0 0.0
        %678 = vmatpush1.msra.mxu0 0.0
        %679 = vmatprep.subr.mxu0 0.0
        %680 = vmatpush1.msra.mxu0 0.0
        %681 = vmatprep.subr.mxu0 0.0
        %682 = vmatpush1.msra.mxu0 0.0
        %683 = vmatprep.subr.mxu0 0.0
        %684 = vmatpush1.msra.mxu0 0.0
        %685 = vmatprep.subr.mxu0 0.0
        %686 = vmatpush1.msra.mxu0 0.0
        %687 = vmatprep.subr.mxu0 0.0
        %688 = vmatpush1.msra.mxu0 0.0
        %689 = vmatprep.subr.mxu0 0.0
        %690 = vmatpush1.msra.mxu0 0.0
        %691 = vmatprep.subr.mxu0 0.0
        %692 = vmatpush1.msra.mxu0 0.0
        %693 = vmatprep.subr.mxu0 0.0
        %694 = vmatpush1.msra.mxu0 0.0
        %695 = vmatprep.subr.mxu0 0.0
        %696 = vmatpush1.msra.mxu0 0.0
        %697 = vmatprep.subr.mxu0 0.0
        %698 = vmatpush1.msra.mxu0 0.0
        %699 = vmatprep.mubr.f32.mxu0 0.0
        %700 = vmatmul.mubr.f32.gmra.mrb[0].mxu0 %v357
        %v701 = vpop.f32.mrb[0].mxu0
        %v702 = vadd.f32 %v338, %v701
        %v703 = vpop.f32.mrb[0].mxu0
        %v704 = vadd.f32 %v338, %v703
        %705 = vmatprep.mubr.f32.mxu0 0.0
        %706 = vmatmul.mubr.f32.gmra.mrb[0].mxu0 %v360
        %v707 = vpop.f32.mrb[0].mxu0
        %v708 = vadd.f32 %v343, %v707
        %v709 = vpop.f32.mrb[0].mxu0
        %v710 = vadd.f32 %v343, %v709
        %711 = vmatprep.mubr.f32.mxu0 0.0
        %712 = vmatmul.mubr.f32.gmra.mrb[0].mxu0 %v363
        %v713 = vpop.f32.mrb[0].mxu0
        %v714 = vadd.f32 %v348, %v713
        %v715 = vpop.f32.mrb[0].mxu0
        %v716 = vadd.f32 %v348, %v715
        %717 = vmatprep.mubr.f32.mxu0 0.0
        %718 = vmatmul.mubr.f32.gmra.mrb[0].mxu0 %v366
        %v719 = vpop.f32.mrb[0].mxu0
        %v720 = vadd.f32 %v353, %v719
        %v721 = vpop.f32.mrb[0].mxu0
        %v722 = vadd.f32 %v353, %v721
        %723 = vdwg.mxu0
        %724 = vmatprep.subr.mxu0 %v272
        %725 = vmatpush1.msra.mxu0 %v271
        %726 = vmatprep.subr.mxu0 %v288
        %727 = vmatpush1.msra.mxu0 %v287
        %728 = vmatprep.subr.mxu0 %v304
        %729 = vmatpush1.msra.mxu0 %v303
        %730 = vmatprep.subr.mxu0 %v320
        %731 = vmatpush1.msra.mxu0 %v319
        %732 = vmatprep.subr.mxu0 0.0
        %733 = vmatpush1.msra.mxu0 0.0
        %734 = vmatprep.subr.mxu0 0.0
        %735 = vmatpush1.msra.mxu0 0.0
        %736 = vmatprep.subr.mxu0 0.0
        %737 = vmatpush1.msra.mxu0 0.0
        %738 = vmatprep.subr.mxu0 0.0
        %739 = vmatpush1.msra.mxu0 0.0
        %740 = vmatprep.subr.mxu0 0.0
        %741 = vmatpush1.msra.mxu0 0.0
        %742 = vmatprep.subr.mxu0 0.0
        %743 = vmatpush1.msra.mxu0 0.0
        %744 = vmatprep.subr.mxu0 0.0
        %745 = vmatpush1.msra.mxu0 0.0
        %746 = vmatprep.subr.mxu0 0.0
        %747 = vmatpush1.msra.mxu0 0.0
        %748 = vmatprep.subr.mxu0 0.0
        %749 = vmatpush1.msra.mxu0 0.0
        %750 = vmatprep.subr.mxu0 0.0
        %751 = vmatpush1.msra.mxu0 0.0
        %752 = vmatprep.subr.mxu0 0.0
        %753 = vmatpush1.msra.mxu0 0.0
        %754 = vmatprep.subr.mxu0 0.0
        %755 = vmatpush1.msra.mxu0 0.0
        %756 = vmatprep.subr.mxu0 0.0
        %757 = vmatpush1.msra.mxu0 0.0
        %758 = vmatprep.subr.mxu0 0.0
        %759 = vmatpush1.msra.mxu0 0.0
        %760 = vmatprep.subr.mxu0 0.0
        %761 = vmatpush1.msra.mxu0 0.0
        %762 = vmatprep.subr.mxu0 0.0
        %763 = vmatpush1.msra.mxu0 0.0
        %764 = vmatprep.subr.mxu0 0.0
        %765 = vmatpush1.msra.mxu0 0.0
        %766 = vmatprep.subr.mxu0 0.0
        %767 = vmatpush1.msra.mxu0 0.0
        %768 = vmatprep.subr.mxu0 0.0
        %769 = vmatpush1.msra.mxu0 0.0
        %770 = vmatprep.subr.mxu0 0.0
        %771 = vmatpush1.msra.mxu0 0.0
        %772 = vmatprep.subr.mxu0 0.0
        %773 = vmatpush1.msra.mxu0 0.0
        %774 = vmatprep.subr.mxu0 0.0
        %775 = vmatpush1.msra.mxu0 0.0
        %776 = vmatprep.subr.mxu0 0.0
        %777 = vmatpush1.msra.mxu0 0.0
        %778 = vmatprep.subr.mxu0 0.0
        %779 = vmatpush1.msra.mxu0 0.0
        %780 = vmatprep.subr.mxu0 0.0
        %781 = vmatpush1.msra.mxu0 0.0
        %782 = vmatprep.subr.mxu0 0.0
        %783 = vmatpush1.msra.mxu0 0.0
        %784 = vmatprep.subr.mxu0 0.0
        %785 = vmatpush1.msra.mxu0 0.0
        %786 = vmatprep.subr.mxu0 0.0
        %787 = vmatpush1.msra.mxu0 0.0
        %788 = vmatprep.mubr.f32.mxu0 0.0
        %789 = vmatmul.mubr.f32.gmra.mrb[0].mxu0 %v357
        %v790 = vpop.f32.mrb[0].mxu0
        %v791 = vadd.f32 %v338, %v790
        %v792 = vpop.f32.mrb[0].mxu0
        %v793 = vadd.f32 %v338, %v792
        %794 = vmatprep.mubr.f32.mxu0 0.0
        %795 = vmatmul.mubr.f32.gmra.mrb[0].mxu0 %v360
        %v796 = vpop.f32.mrb[0].mxu0
        %v797 = vadd.f32 %v343, %v796
        %v798 = vpop.f32.mrb[0].mxu0
        %v799 = vadd.f32 %v343, %v798
        %800 = vmatprep.mubr.f32.mxu0 0.0
        %801 = vmatmul.mubr.f32.gmra.mrb[0].mxu0 %v363
        %v802 = vpop.f32.mrb[0].mxu0
        %v803 = vadd.f32 %v348, %v802
        %v804 = vpop.f32.mrb[0].mxu0
        %v805 = vadd.f32 %v348, %v804
        %806 = vmatprep.mubr.f32.mxu0 0.0
        %807 = vmatmul.mubr.f32.gmra.mrb[0].mxu0 %v366
        %v808 = vpop.f32.mrb[0].mxu0
        %v809 = vadd.f32 %v353, %v808
        %v810 = vpop.f32.mrb[0].mxu0
        %v811 = vadd.f32 %v353, %v810
        %812 = vdwg.mxu0
        %813 = vmatprep.subr.mxu0 %v274
        %814 = vmatpush1.msra.mxu0 %v273
        %815 = vmatprep.subr.mxu0 %v290
        %816 = vmatpush1.msra.mxu0 %v289
        %817 = vmatprep.subr.mxu0 %v306
        %818 = vmatpush1.msra.mxu0 %v305
        %819 = vmatprep.subr.mxu0 %v322
        %820 = vmatpush1.msra.mxu0 %v321
        %821 = vmatprep.subr.mxu0 0.0
        %822 = vmatpush1.msra.mxu0 0.0
        %823 = vmatprep.subr.mxu0 0.0
        %824 = vmatpush1.msra.mxu0 0.0
        %825 = vmatprep.subr.mxu0 0.0
        %826 = vmatpush1.msra.mxu0 0.0
        %827 = vmatprep.subr.mxu0 0.0
        %828 = vmatpush1.msra.mxu0 0.0
        %829 = vmatprep.subr.mxu0 0.0
        %830 = vmatpush1.msra.mxu0 0.0
        %831 = vmatprep.subr.mxu0 0.0
        %832 = vmatpush1.msra.mxu0 0.0
        %833 = vmatprep.subr.mxu0 0.0
        %834 = vmatpush1.msra.mxu0 0.0
        %835 = vmatprep.subr.mxu0 0.0
        %836 = vmatpush1.msra.mxu0 0.0
        %837 = vmatprep.subr.mxu0 0.0
        %838 = vmatpush1.msra.mxu0 0.0
        %839 = vmatprep.subr.mxu0 0.0
        %840 = vmatpush1.msra.mxu0 0.0
        %841 = vmatprep.subr.mxu0 0.0
        %842 = vmatpush1.msra.mxu0 0.0
        %843 = vmatprep.subr.mxu0 0.0
        %844 = vmatpush1.msra.mxu0 0.0
        %845 = vmatprep.subr.mxu0 0.0
        %846 = vmatpush1.msra.mxu0 0.0
        %847 = vmatprep.subr.mxu0 0.0
        %848 = vmatpush1.msra.mxu0 0.0
        %849 = vmatprep.subr.mxu0 0.0
        %850 = vmatpush1.msra.mxu0 0.0
        %851 = vmatprep.subr.mxu0 0.0
        %852 = vmatpush1.msra.mxu0 0.0
        %853 = vmatprep.subr.mxu0 0.0
        %854 = vmatpush1.msra.mxu0 0.0
        %855 = vmatprep.subr.mxu0 0.0
        %856 = vmatpush1.msra.mxu0 0.0
        %857 = vmatprep.subr.mxu0 0.0
        %858 = vmatpush1.msra.mxu0 0.0
        %859 = vmatprep.subr.mxu0 0.0
        %860 = vmatpush1.msra.mxu0 0.0
        %861 = vmatprep.subr.mxu0 0.0
        %862 = vmatpush1.msra.mxu0 0.0
        %863 = vmatprep.subr.mxu0 0.0
        %864 = vmatpush1.msra.mxu0 0.0
        %865 = vmatprep.subr.mxu0 0.0
        %866 = vmatpush1.msra.mxu0 0.0
        %867 = vmatprep.subr.mxu0 0.0
        %868 = vmatpush1.msra.mxu0 0.0
        %869 = vmatprep.subr.mxu0 0.0
        %870 = vmatpush1.msra.mxu0 0.0
        %871 = vmatprep.subr.mxu0 0.0
        %872 = vmatpush1.msra.mxu0 0.0
        %873 = vmatprep.subr.mxu0 0.0
        %874 = vmatpush1.msra.mxu0 0.0
        %875 = vmatprep.subr.mxu0 0.0
        %876 = vmatpush1.msra.mxu0 0.0
        %877 = vmatprep.mubr.f32.mxu0 0.0
        %878 = vmatmul.mubr.f32.gmra.mrb[0].mxu0 %v357
        %v879 = vpop.f32.mrb[0].mxu0
        %v880 = vadd.f32 %v338, %v879
        %v881 = vpop.f32.mrb[0].mxu0
        %v882 = vadd.f32 %v338, %v881
        %883 = vmatprep.mubr.f32.mxu0 0.0
        %884 = vmatmul.mubr.f32.gmra.mrb[0].mxu0 %v360
        %v885 = vpop.f32.mrb[0].mxu0
        %v886 = vadd.f32 %v343, %v885
        %v887 = vpop.f32.mrb[0].mxu0
        %v888 = vadd.f32 %v343, %v887
        %889 = vmatprep.mubr.f32.mxu0 0.0
        %890 = vmatmul.mubr.f32.gmra.mrb[0].mxu0 %v363
        %v891 = vpop.f32.mrb[0].mxu0
        %v892 = vadd.f32 %v348, %v891
        %v893 = vpop.f32.mrb[0].mxu0
        %v894 = vadd.f32 %v348, %v893
        %895 = vmatprep.mubr.f32.mxu0 0.0
        %896 = vmatmul.mubr.f32.gmra.mrb[0].mxu0 %v366
        %v897 = vpop.f32.mrb[0].mxu0
        %v898 = vadd.f32 %v353, %v897
        %v899 = vpop.f32.mrb[0].mxu0
        %v900 = vadd.f32 %v353, %v899
        %901 = vdwg.mxu0
        %902 = vmatprep.subr.mxu0 %v276
        %903 = vmatpush1.msra.mxu0 %v275
        %904 = vmatprep.subr.mxu0 %v292
        %905 = vmatpush1.msra.mxu0 %v291
        %906 = vmatprep.subr.mxu0 %v308
        %907 = vmatpush1.msra.mxu0 %v307
        %908 = vmatprep.subr.mxu0 %v324
        %909 = vmatpush1.msra.mxu0 %v323
        %910 = vmatprep.subr.mxu0 0.0
        %911 = vmatpush1.msra.mxu0 0.0
        %912 = vmatprep.subr.mxu0 0.0
        %913 = vmatpush1.msra.mxu0 0.0
        %914 = vmatprep.subr.mxu0 0.0
        %915 = vmatpush1.msra.mxu0 0.0
        %916 = vmatprep.subr.mxu0 0.0
        %917 = vmatpush1.msra.mxu0 0.0
        %918 = vmatprep.subr.mxu0 0.0
        %919 = vmatpush1.msra.mxu0 0.0
        %920 = vmatprep.subr.mxu0 0.0
        %921 = vmatpush1.msra.mxu0 0.0
        %922 = vmatprep.subr.mxu0 0.0
        %923 = vmatpush1.msra.mxu0 0.0
        %924 = vmatprep.subr.mxu0 0.0
        %925 = vmatpush1.msra.mxu0 0.0
        %926 = vmatprep.subr.mxu0 0.0
        %927 = vmatpush1.msra.mxu0 0.0
        %928 = vmatprep.subr.mxu0 0.0
        %929 = vmatpush1.msra.mxu0 0.0
        %930 = vmatprep.subr.mxu0 0.0
        %931 = vmatpush1.msra.mxu0 0.0
        %932 = vmatprep.subr.mxu0 0.0
        %933 = vmatpush1.msra.mxu0 0.0
        %934 = vmatprep.subr.mxu0 0.0
        %935 = vmatpush1.msra.mxu0 0.0
        %936 = vmatprep.subr.mxu0 0.0
        %937 = vmatpush1.msra.mxu0 0.0
        %938 = vmatprep.subr.mxu0 0.0
        %939 = vmatpush1.msra.mxu0 0.0
        %940 = vmatprep.subr.mxu0 0.0
        %941 = vmatpush1.msra.mxu0 0.0
        %942 = vmatprep.subr.mxu0 0.0
        %943 = vmatpush1.msra.mxu0 0.0
        %944 = vmatprep.subr.mxu0 0.0
        %945 = vmatpush1.msra.mxu0 0.0
        %946 = vmatprep.subr.mxu0 0.0
        %947 = vmatpush1.msra.mxu0 0.0
        %948 = vmatprep.subr.mxu0 0.0
        %949 = vmatpush1.msra.mxu0 0.0
        %950 = vmatprep.subr.mxu0 0.0
        %951 = vmatpush1.msra.mxu0 0.0
        %952 = vmatprep.subr.mxu0 0.0
        %953 = vmatpush1.msra.mxu0 0.0
        %954 = vmatprep.subr.mxu0 0.0
        %955 = vmatpush1.msra.mxu0 0.0
        %956 = vmatprep.subr.mxu0 0.0
        %957 = vmatpush1.msra.mxu0 0.0
        %958 = vmatprep.subr.mxu0 0.0
        %959 = vmatpush1.msra.mxu0 0.0
        %960 = vmatprep.subr.mxu0 0.0
        %961 = vmatpush1.msra.mxu0 0.0
        %962 = vmatprep.subr.mxu0 0.0
        %963 = vmatpush1.msra.mxu0 0.0
        %964 = vmatprep.subr.mxu0 0.0
        %965 = vmatpush1.msra.mxu0 0.0
        %966 = vmatprep.mubr.f32.mxu0 0.0
        %967 = vmatmul.mubr.f32.gmra.mrb[0].mxu0 %v357
        %v968 = vpop.f32.mrb[0].mxu0
        %v969 = vadd.f32 %v338, %v968
        %v970 = vpop.f32.mrb[0].mxu0
        %v971 = vadd.f32 %v338, %v970
        %972 = vmatprep.mubr.f32.mxu0 0.0
        %973 = vmatmul.mubr.f32.gmra.mrb[0].mxu0 %v360
        %v974 = vpop.f32.mrb[0].mxu0
        %v975 = vadd.f32 %v343, %v974
        %v976 = vpop.f32.mrb[0].mxu0
        %v977 = vadd.f32 %v343, %v976
        %978 = vmatprep.mubr.f32.mxu0 0.0
        %979 = vmatmul.mubr.f32.gmra.mrb[0].mxu0 %v363
        %v980 = vpop.f32.mrb[0].mxu0
        %v981 = vadd.f32 %v348, %v980
        %v982 = vpop.f32.mrb[0].mxu0
        %v983 = vadd.f32 %v348, %v982
        %984 = vmatprep.mubr.f32.mxu0 0.0
        %985 = vmatmul.mubr.f32.gmra.mrb[0].mxu0 %v366
        %v986 = vpop.f32.mrb[0].mxu0
        %v987 = vadd.f32 %v353, %v986
        %v988 = vpop.f32.mrb[0].mxu0
        %v989 = vadd.f32 %v353, %v988
        %990 = vdwg.mxu0
        %991 = vmatprep.subr.mxu0 %v278
        %992 = vmatpush1.msra.mxu0 %v277
        %993 = vmatprep.subr.mxu0 %v294
        %994 = vmatpush1.msra.mxu0 %v293
        %995 = vmatprep.subr.mxu0 %v310
        %996 = vmatpush1.msra.mxu0 %v309
        %997 = vmatprep.subr.mxu0 %v326
        %998 = vmatpush1.msra.mxu0 %v325
        %999 = vmatprep.subr.mxu0 0.0
        %1000 = vmatpush1.msra.mxu0 0.0
        %1001 = vmatprep.subr.mxu0 0.0
        %1002 = vmatpush1.msra.mxu0 0.0
        %1003 = vmatprep.subr.mxu0 0.0
        %1004 = vmatpush1.msra.mxu0 0.0
        %1005 = vmatprep.subr.mxu0 0.0
        %1006 = vmatpush1.msra.mxu0 0.0
        %1007 = vmatprep.subr.mxu0 0.0
        %1008 = vmatpush1.msra.mxu0 0.0
        %1009 = vmatprep.subr.mxu0 0.0
        %1010 = vmatpush1.msra.mxu0 0.0
        %1011 = vmatprep.subr.mxu0 0.0
        %1012 = vmatpush1.msra.mxu0 0.0
        %1013 = vmatprep.subr.mxu0 0.0
        %1014 = vmatpush1.msra.mxu0 0.0
        %1015 = vmatprep.subr.mxu0 0.0
        %1016 = vmatpush1.msra.mxu0 0.0
        %1017 = vmatprep.subr.mxu0 0.0
        %1018 = vmatpush1.msra.mxu0 0.0
        %1019 = vmatprep.subr.mxu0 0.0
        %1020 = vmatpush1.msra.mxu0 0.0
        %1021 = vmatprep.subr.mxu0 0.0
        %1022 = vmatpush1.msra.mxu0 0.0
        %1023 = vmatprep.subr.mxu0 0.0
        %1024 = vmatpush1.msra.mxu0 0.0
        %1025 = vmatprep.subr.mxu0 0.0
        %1026 = vmatpush1.msra.mxu0 0.0
        %1027 = vmatprep.subr.mxu0 0.0
        %1028 = vmatpush1.msra.mxu0 0.0
        %1029 = vmatprep.subr.mxu0 0.0
        %1030 = vmatpush1.msra.mxu0 0.0
        %1031 = vmatprep.subr.mxu0 0.0
        %1032 = vmatpush1.msra.mxu0 0.0
        %1033 = vmatprep.subr.mxu0 0.0
        %1034 = vmatpush1.msra.mxu0 0.0
        %1035 = vmatprep.subr.mxu0 0.0
        %1036 = vmatpush1.msra.mxu0 0.0
        %1037 = vmatprep.subr.mxu0 0.0
        %1038 = vmatpush1.msra.mxu0 0.0
        %1039 = vmatprep.subr.mxu0 0.0
        %1040 = vmatpush1.msra.mxu0 0.0
        %1041 = vmatprep.subr.mxu0 0.0
        %1042 = vmatpush1.msra.mxu0 0.0
        %1043 = vmatprep.subr.mxu0 0.0
        %1044 = vmatpush1.msra.mxu0 0.0
        %1045 = vmatprep.subr.mxu0 0.0
        %1046 = vmatpush1.msra.mxu0 0.0
        %1047 = vmatprep.subr.mxu0 0.0
        %1048 = vmatpush1.msra.mxu0 0.0
        %1049 = vmatprep.subr.mxu0 0.0
        %1050 = vmatpush1.msra.mxu0 0.0
        %1051 = vmatprep.subr.mxu0 0.0
        %1052 = vmatpush1.msra.mxu0 0.0
        %1053 = vmatprep.subr.mxu0 0.0
        %1054 = vmatpush1.msra.mxu0 0.0
        %1055 = vmatprep.mubr.f32.mxu0 0.0
        %1056 = vmatmul.mubr.f32.gmra.mrb[0].mxu0 %v357
        %v1057 = vpop.f32.mrb[0].mxu0
        %v1058 = vadd.f32 %v338, %v1057
        %v1059 = vpop.f32.mrb[0].mxu0
        %v1060 = vadd.f32 %v338, %v1059
        %1061 = vmatprep.mubr.f32.mxu0 0.0
        %1062 = vmatmul.mubr.f32.gmra.mrb[0].mxu0 %v360
        %v1063 = vpop.f32.mrb[0].mxu0
        %v1064 = vadd.f32 %v343, %v1063
        %v1065 = vpop.f32.mrb[0].mxu0
        %v1066 = vadd.f32 %v343, %v1065
        %1067 = vmatprep.mubr.f32.mxu0 0.0
        %1068 = vmatmul.mubr.f32.gmra.mrb[0].mxu0 %v363
        %v1069 = vpop.f32.mrb[0].mxu0
        %v1070 = vadd.f32 %v348, %v1069
        %v1071 = vpop.f32.mrb[0].mxu0
        %v1072 = vadd.f32 %v348, %v1071
        %1073 = vmatprep.mubr.f32.mxu0 0.0
        %1074 = vmatmul.mubr.f32.gmra.mrb[0].mxu0 %v366
        %v1075 = vpop.f32.mrb[0].mxu0
        %v1076 = vadd.f32 %v353, %v1075
        %v1077 = vpop.f32.mrb[0].mxu0
        %v1078 = vadd.f32 %v353, %v1077
        %1079 = vdwg.mxu0
        %vm1080 = vcmp.gt.f32.partialorder %v435, 0.0
        %vm1081 = vcmp.gt.f32.partialorder %v437, 0.0
        %vm1082 = vcmp.gt.f32.partialorder %v524, 0.0
        %vm1083 = vcmp.gt.f32.partialorder %v526, 0.0
        %vm1084 = vcmp.gt.f32.partialorder %v613, 0.0
        %vm1085 = vcmp.gt.f32.partialorder %v615, 0.0
        %vm1086 = vcmp.gt.f32.partialorder %v702, 0.0
        %vm1087 = vcmp.gt.f32.partialorder %v704, 0.0
        %vm1088 = vcmp.gt.f32.partialorder %v791, 0.0
        %vm1089 = vcmp.gt.f32.partialorder %v793, 0.0
        %vm1090 = vcmp.gt.f32.partialorder %v880, 0.0
        %vm1091 = vcmp.gt.f32.partialorder %v882, 0.0
        %vm1092 = vcmp.gt.f32.partialorder %v969, 0.0
        %vm1093 = vcmp.gt.f32.partialorder %v971, 0.0
        %vm1094 = vcmp.gt.f32.partialorder %v1058, 0.0
        %vm1095 = vcmp.gt.f32.partialorder %v1060, 0.0
        %vm1096 = vcmp.gt.f32.partialorder %v441, 0.0
        %vm1097 = vcmp.gt.f32.partialorder %v443, 0.0
        %vm1098 = vcmp.gt.f32.partialorder %v530, 0.0
        %vm1099 = vcmp.gt.f32.partialorder %v532, 0.0
        %vm1100 = vcmp.gt.f32.partialorder %v619, 0.0
        %vm1101 = vcmp.gt.f32.partialorder %v621, 0.0
        %vm1102 = vcmp.gt.f32.partialorder %v708, 0.0
        %vm1103 = vcmp.gt.f32.partialorder %v710, 0.0
        %vm1104 = vcmp.gt.f32.partialorder %v797, 0.0
        %vm1105 = vcmp.gt.f32.partialorder %v799, 0.0
        %vm1106 = vcmp.gt.f32.partialorder %v886, 0.0
        %vm1107 = vcmp.gt.f32.partialorder %v888, 0.0
        %vm1108 = vcmp.gt.f32.partialorder %v975, 0.0
        %vm1109 = vcmp.gt.f32.partialorder %v977, 0.0
        %vm1110 = vcmp.gt.f32.partialorder %v1064, 0.0
        %vm1111 = vcmp.gt.f32.partialorder %v1066, 0.0
        %vm1112 = vcmp.gt.f32.partialorder %v447, 0.0
        %vm1113 = vcmp.gt.f32.partialorder %v449, 0.0
        %vm1114 = vcmp.gt.f32.partialorder %v536, 0.0
        %vm1115 = vcmp.gt.f32.partialorder %v538, 0.0
        %vm1116 = vcmp.gt.f32.partialorder %v625, 0.0
        %vm1117 = vcmp.gt.f32.partialorder %v627, 0.0
        %vm1118 = vcmp.gt.f32.partialorder %v714, 0.0
        %vm1119 = vcmp.gt.f32.partialorder %v716, 0.0
        %vm1120 = vcmp.gt.f32.partialorder %v803, 0.0
        %vm1121 = vcmp.gt.f32.partialorder %v805, 0.0
        %vm1122 = vcmp.gt.f32.partialorder %v892, 0.0
        %vm1123 = vcmp.gt.f32.partialorder %v894, 0.0
        %vm1124 = vcmp.gt.f32.partialorder %v981, 0.0
        %vm1125 = vcmp.gt.f32.partialorder %v983, 0.0
        %vm1126 = vcmp.gt.f32.partialorder %v1070, 0.0
        %vm1127 = vcmp.gt.f32.partialorder %v1072, 0.0
        %vm1128 = vcmp.gt.f32.partialorder %v453, 0.0
        %vm1129 = vcmp.gt.f32.partialorder %v455, 0.0
        %vm1130 = vcmp.gt.f32.partialorder %v542, 0.0
        %vm1131 = vcmp.gt.f32.partialorder %v544, 0.0
        %vm1132 = vcmp.gt.f32.partialorder %v631, 0.0
        %vm1133 = vcmp.gt.f32.partialorder %v633, 0.0
        %vm1134 = vcmp.gt.f32.partialorder %v720, 0.0
        %vm1135 = vcmp.gt.f32.partialorder %v722, 0.0
        %vm1136 = vcmp.gt.f32.partialorder %v809, 0.0
        %vm1137 = vcmp.gt.f32.partialorder %v811, 0.0
        %vm1138 = vcmp.gt.f32.partialorder %v898, 0.0
        %vm1139 = vcmp.gt.f32.partialorder %v900, 0.0
        %vm1140 = vcmp.gt.f32.partialorder %v987, 0.0
        %vm1141 = vcmp.gt.f32.partialorder %v989, 0.0
        %vm1142 = vcmp.gt.f32.partialorder %v1076, 0.0
        %vm1143 = vcmp.gt.f32.partialorder %v1078, 0.0
        %v1144 = vmul.f32 %v435, 0.01
        %v1145 = vmul.f32 %v437, 0.01
        %v1146 = vmul.f32 %v524, 0.01
        %v1147 = vmul.f32 %v526, 0.01
        %v1148 = vmul.f32 %v613, 0.01
        %v1149 = vmul.f32 %v615, 0.01
        %v1150 = vmul.f32 %v702, 0.01
        %v1151 = vmul.f32 %v704, 0.01
        %v1152 = vmul.f32 %v791, 0.01
        %v1153 = vmul.f32 %v793, 0.01
        %v1154 = vmul.f32 %v880, 0.01
        %v1155 = vmul.f32 %v882, 0.01
        %v1156 = vmul.f32 %v969, 0.01
        %v1157 = vmul.f32 %v971, 0.01
        %v1158 = vmul.f32 %v1058, 0.01
        %v1159 = vmul.f32 %v1060, 0.01
        %v1160 = vmul.f32 %v441, 0.01
        %v1161 = vmul.f32 %v443, 0.01
        %v1162 = vmul.f32 %v530, 0.01
        %v1163 = vmul.f32 %v532, 0.01
        %v1164 = vmul.f32 %v619, 0.01
        %v1165 = vmul.f32 %v621, 0.01
        %v1166 = vmul.f32 %v708, 0.01
        %v1167 = vmul.f32 %v710, 0.01
        %v1168 = vmul.f32 %v797, 0.01
        %v1169 = vmul.f32 %v799, 0.01
        %v1170 = vmul.f32 %v886, 0.01
        %v1171 = vmul.f32 %v888, 0.01
        %v1172 = vmul.f32 %v975, 0.01
        %v1173 = vmul.f32 %v977, 0.01
        %v1174 = vmul.f32 %v1064, 0.01
        %v1175 = vmul.f32 %v1066, 0.01
        %v1176 = vmul.f32 %v447, 0.01
        %v1177 = vmul.f32 %v449, 0.01
        %v1178 = vmul.f32 %v536, 0.01
        %v1179 = vmul.f32 %v538, 0.01
        %v1180 = vmul.f32 %v625, 0.01
        %v1181 = vmul.f32 %v627, 0.01
        %v1182 = vmul.f32 %v714, 0.01
        %v1183 = vmul.f32 %v716, 0.01
        %v1184 = vmul.f32 %v803, 0.01
        %v1185 = vmul.f32 %v805, 0.01
        %v1186 = vmul.f32 %v892, 0.01
        %v1187 = vmul.f32 %v894, 0.01
        %v1188 = vmul.f32 %v981, 0.01
        %v1189 = vmul.f32 %v983, 0.01
        %v1190 = vmul.f32 %v1070, 0.01
        %v1191 = vmul.f32 %v1072, 0.01
        %v1192 = vmul.f32 %v453, 0.01
        %v1193 = vmul.f32 %v455, 0.01
        %v1194 = vmul.f32 %v542, 0.01
        %v1195 = vmul.f32 %v544, 0.01
        %v1196 = vmul.f32 %v631, 0.01
        %v1197 = vmul.f32 %v633, 0.01
        %v1198 = vmul.f32 %v720, 0.01
        %v1199 = vmul.f32 %v722, 0.01
        %v1200 = vmul.f32 %v809, 0.01
        %v1201 = vmul.f32 %v811, 0.01
        %v1202 = vmul.f32 %v898, 0.01
        %v1203 = vmul.f32 %v900, 0.01
        %v1204 = vmul.f32 %v987, 0.01
        %v1205 = vmul.f32 %v989, 0.01
        %v1206 = vmul.f32 %v1076, 0.01
        %v1207 = vmul.f32 %v1078, 0.01
        %v1208 = vsel %vm1080, %v435, %v1144
        %v1209 = vsel %vm1081, %v437, %v1145
        %v1210 = vsel %vm1082, %v524, %v1146
        %v1211 = vsel %vm1083, %v526, %v1147
        %v1212 = vsel %vm1084, %v613, %v1148
        %v1213 = vsel %vm1085, %v615, %v1149
        %v1214 = vsel %vm1086, %v702, %v1150
        %v1215 = vsel %vm1087, %v704, %v1151
        %v1216 = vsel %vm1088, %v791, %v1152
        %v1217 = vsel %vm1089, %v793, %v1153
        %v1218 = vsel %vm1090, %v880, %v1154
        %v1219 = vsel %vm1091, %v882, %v1155
        %v1220 = vsel %vm1092, %v969, %v1156
        %v1221 = vsel %vm1093, %v971, %v1157
        %v1222 = vsel %vm1094, %v1058, %v1158
        %v1223 = vsel %vm1095, %v1060, %v1159
        %v1224 = vsel %vm1096, %v441, %v1160
        %v1225 = vsel %vm1097, %v443, %v1161
        %v1226 = vsel %vm1098, %v530, %v1162
        %v1227 = vsel %vm1099, %v532, %v1163
        %v1228 = vsel %vm1100, %v619, %v1164
        %v1229 = vsel %vm1101, %v621, %v1165
        %v1230 = vsel %vm1102, %v708, %v1166
        %v1231 = vsel %vm1103, %v710, %v1167
        %v1232 = vsel %vm1104, %v797, %v1168
        %v1233 = vsel %vm1105, %v799, %v1169
        %v1234 = vsel %vm1106, %v886, %v1170
        %v1235 = vsel %vm1107, %v888, %v1171
        %v1236 = vsel %vm1108, %v975, %v1172
        %v1237 = vsel %vm1109, %v977, %v1173
        %v1238 = vsel %vm1110, %v1064, %v1174
        %v1239 = vsel %vm1111, %v1066, %v1175
        %v1240 = vsel %vm1112, %v447, %v1176
        %v1241 = vsel %vm1113, %v449, %v1177
        %v1242 = vsel %vm1114, %v536, %v1178
        %v1243 = vsel %vm1115, %v538, %v1179
        %v1244 = vsel %vm1116, %v625, %v1180
        %v1245 = vsel %vm1117, %v627, %v1181
        %v1246 = vsel %vm1118, %v714, %v1182
        %v1247 = vsel %vm1119, %v716, %v1183
        %v1248 = vsel %vm1120, %v803, %v1184
        %v1249 = vsel %vm1121, %v805, %v1185
        %v1250 = vsel %vm1122, %v892, %v1186
        %v1251 = vsel %vm1123, %v894, %v1187
        %v1252 = vsel %vm1124, %v981, %v1188
        %v1253 = vsel %vm1125, %v983, %v1189
        %v1254 = vsel %vm1126, %v1070, %v1190
        %v1255 = vsel %vm1127, %v1072, %v1191
        %v1256 = vsel %vm1128, %v453, %v1192
        %v1257 = vsel %vm1129, %v455, %v1193
        %v1258 = vsel %vm1130, %v542, %v1194
        %v1259 = vsel %vm1131, %v544, %v1195
        %v1260 = vsel %vm1132, %v631, %v1196
        %v1261 = vsel %vm1133, %v633, %v1197
        %v1262 = vsel %vm1134, %v720, %v1198
        %v1263 = vsel %vm1135, %v722, %v1199
        %v1264 = vsel %vm1136, %v809, %v1200
        %v1265 = vsel %vm1137, %v811, %v1201
        %v1266 = vsel %vm1138, %v898, %v1202
        %v1267 = vsel %vm1139, %v900, %v1203
        %v1268 = vsel %vm1140, %v987, %v1204
        %v1269 = vsel %vm1141, %v989, %v1205
        %v1270 = vsel %vm1142, %v1076, %v1206
        %v1271 = vsel %vm1143, %v1078, %v1207
        %v1272 = vld [vmem:[%s3] sm:$0xff]
        %v1273 = vld [vmem:[%s3 + $0x8] sm:$0xff]
        %v1274 = vld [vmem:[%s3 + $0x10] sm:$0xff]
        %v1275 = vld [vmem:[%s3 + $0x18] sm:$0xff]
        %v1276 = vld [vmem:[%s4] sm:$0xff]
        %v1277 = vld [vmem:[%s4 + $0x8] sm:$0xff]
        %v1278 = vld [vmem:[%s4 + $0x10] sm:$0xff]
        %v1279 = vld [vmem:[%s4 + $0x18] sm:$0xff]
        %1281 = vset.pattern.permute.xlu0 0
        %1282 = vperm.xlu0 %1281, %v1276
        %v1283 = vpop.permute.xlu0 %1282
        %1286 = vset.pattern.permute.xlu0 0
        %1287 = vperm.xlu0 %1286, %v1277
        %v1288 = vpop.permute.xlu0 %1287
        %1291 = vset.pattern.permute.xlu0 0
        %1292 = vperm.xlu0 %1291, %v1278
        %v1293 = vpop.permute.xlu0 %1292
        %1296 = vset.pattern.permute.xlu0 0
        %1297 = vperm.xlu0 %1296, %v1279
        %v1298 = vpop.permute.xlu0 %1297
        %v1301 = vsel %vm355, %v1272, 0
        %v1304 = vsel %vm355, %v1273, 0
        %v1307 = vsel %vm355, %v1274, 0
        %v1310 = vsel %vm355, %v1275, 0
        %1312 = vmatprep.subr.mxu0 %v1209
        %1313 = vmatpush1.msra.mxu0 %v1208
        %1314 = vmatprep.subr.mxu0 %v1225
        %1315 = vmatpush1.msra.mxu0 %v1224
        %1316 = vmatprep.subr.mxu0 %v1241
        %1317 = vmatpush1.msra.mxu0 %v1240
        %1318 = vmatprep.subr.mxu0 %v1257
        %1319 = vmatpush1.msra.mxu0 %v1256
        %1320 = vmatprep.subr.mxu0 0.0
        %1321 = vmatpush1.msra.mxu0 0.0
        %1322 = vmatprep.subr.mxu0 0.0
        %1323 = vmatpush1.msra.mxu0 0.0
        %1324 = vmatprep.subr.mxu0 0.0
        %1325 = vmatpush1.msra.mxu0 0.0
        %1326 = vmatprep.subr.mxu0 0.0
        %1327 = vmatpush1.msra.mxu0 0.0
        %1328 = vmatprep.subr.mxu0 0.0
        %1329 = vmatpush1.msra.mxu0 0.0
        %1330 = vmatprep.subr.mxu0 0.0
        %1331 = vmatpush1.msra.mxu0 0.0
        %1332 = vmatprep.subr.mxu0 0.0
        %1333 = vmatpush1.msra.mxu0 0.0
        %1334 = vmatprep.subr.mxu0 0.0
        %1335 = vmatpush1.msra.mxu0 0.0
        %1336 = vmatprep.subr.mxu0 0.0
        %1337 = vmatpush1.msra.mxu0 0.0
        %1338 = vmatprep.subr.mxu0 0.0
        %1339 = vmatpush1.msra.mxu0 0.0
        %1340 = vmatprep.subr.mxu0 0.0
        %1341 = vmatpush1.msra.mxu0 0.0
        %1342 = vmatprep.subr.mxu0 0.0
        %1343 = vmatpush1.msra.mxu0 0.0
        %1344 = vmatprep.subr.mxu0 0.0
        %1345 = vmatpush1.msra.mxu0 0.0
        %1346 = vmatprep.subr.mxu0 0.0
        %1347 = vmatpush1.msra.mxu0 0.0
        %1348 = vmatprep.subr.mxu0 0.0
        %1349 = vmatpush1.msra.mxu0 0.0
        %1350 = vmatprep.subr.mxu0 0.0
        %1351 = vmatpush1.msra.mxu0 0.0
        %1352 = vmatprep.subr.mxu0 0.0
        %1353 = vmatpush1.msra.mxu0 0.0
        %1354 = vmatprep.subr.mxu0 0.0
        %1355 = vmatpush1.msra.mxu0 0.0
        %1356 = vmatprep.subr.mxu0 0.0
        %1357 = vmatpush1.msra.mxu0 0.0
        %1358 = vmatprep.subr.mxu0 0.0
        %1359 = vmatpush1.msra.mxu0 0.0
        %1360 = vmatprep.subr.mxu0 0.0
        %1361 = vmatpush1.msra.mxu0 0.0
        %1362 = vmatprep.subr.mxu0 0.0
        %1363 = vmatpush1.msra.mxu0 0.0
        %1364 = vmatprep.subr.mxu0 0.0
        %1365 = vmatpush1.msra.mxu0 0.0
        %1366 = vmatprep.subr.mxu0 0.0
        %1367 = vmatpush1.msra.mxu0 0.0
        %1368 = vmatprep.subr.mxu0 0.0
        %1369 = vmatpush1.msra.mxu0 0.0
        %1370 = vmatprep.subr.mxu0 0.0
        %1371 = vmatpush1.msra.mxu0 0.0
        %1372 = vmatprep.subr.mxu0 0.0
        %1373 = vmatpush1.msra.mxu0 0.0
        %1374 = vmatprep.subr.mxu0 0.0
        %1375 = vmatpush1.msra.mxu0 0.0
        %1376 = vmatprep.mubr.f32.mxu0 0.0
        %1377 = vmatmul.mubr.f32.gmra.mrb[0].mxu0 %v1301
        %v1378 = vpop.f32.mrb[0].mxu0
        %v1379 = vadd.f32 %v1283, %v1378
        %v1380 = vpop.f32.mrb[0].mxu0
        %v1381 = vadd.f32 %v1283, %v1380
        %1382 = vmatprep.mubr.f32.mxu0 0.0
        %1383 = vmatmul.mubr.f32.gmra.mrb[0].mxu0 %v1304
        %v1384 = vpop.f32.mrb[0].mxu0
        %v1385 = vadd.f32 %v1288, %v1384
        %v1386 = vpop.f32.mrb[0].mxu0
        %v1387 = vadd.f32 %v1288, %v1386
        %1388 = vmatprep.mubr.f32.mxu0 0.0
        %1389 = vmatmul.mubr.f32.gmra.mrb[0].mxu0 %v1307
        %v1390 = vpop.f32.mrb[0].mxu0
        %v1391 = vadd.f32 %v1293, %v1390
        %v1392 = vpop.f32.mrb[0].mxu0
        %v1393 = vadd.f32 %v1293, %v1392
        %1394 = vmatprep.mubr.f32.mxu0 0.0
        %1395 = vmatmul.mubr.f32.gmra.mrb[0].mxu0 %v1310
        %v1396 = vpop.f32.mrb[0].mxu0
        %v1397 = vadd.f32 %v1298, %v1396
        %v1398 = vpop.f32.mrb[0].mxu0
        %v1399 = vadd.f32 %v1298, %v1398
        %1400 = vdwg.mxu0
        %1401 = vmatprep.subr.mxu0 %v1211
        %1402 = vmatpush1.msra.mxu0 %v1210
        %1403 = vmatprep.subr.mxu0 %v1227
        %1404 = vmatpush1.msra.mxu0 %v1226
        %1405 = vmatprep.subr.mxu0 %v1243
        %1406 = vmatpush1.msra.mxu0 %v1242
        %1407 = vmatprep.subr.mxu0 %v1259
        %1408 = vmatpush1.msra.mxu0 %v1258
        %1409 = vmatprep.subr.mxu0 0.0
        %1410 = vmatpush1.msra.mxu0 0.0
        %1411 = vmatprep.subr.mxu0 0.0
        %1412 = vmatpush1.msra.mxu0 0.0
        %1413 = vmatprep.subr.mxu0 0.0
        %1414 = vmatpush1.msra.mxu0 0.0
        %1415 = vmatprep.subr.mxu0 0.0
        %1416 = vmatpush1.msra.mxu0 0.0
        %1417 = vmatprep.subr.mxu0 0.0
        %1418 = vmatpush1.msra.mxu0 0.0
        %1419 = vmatprep.subr.mxu0 0.0
        %1420 = vmatpush1.msra.mxu0 0.0
        %1421 = vmatprep.subr.mxu0 0.0
        %1422 = vmatpush1.msra.mxu0 0.0
        %1423 = vmatprep.subr.mxu0 0.0
        %1424 = vmatpush1.msra.mxu0 0.0
        %1425 = vmatprep.subr.mxu0 0.0
        %1426 = vmatpush1.msra.mxu0 0.0
        %1427 = vmatprep.subr.mxu0 0.0
        %1428 = vmatpush1.msra.mxu0 0.0
        %1429 = vmatprep.subr.mxu0 0.0
        %1430 = vmatpush1.msra.mxu0 0.0
        %1431 = vmatprep.subr.mxu0 0.0
        %1432 = vmatpush1.msra.mxu0 0.0
        %1433 = vmatprep.subr.mxu0 0.0
        %1434 = vmatpush1.msra.mxu0 0.0
        %1435 = vmatprep.subr.mxu0 0.0
        %1436 = vmatpush1.msra.mxu0 0.0
        %1437 = vmatprep.subr.mxu0 0.0
        %1438 = vmatpush1.msra.mxu0 0.0
        %1439 = vmatprep.subr.mxu0 0.0
        %1440 = vmatpush1.msra.mxu0 0.0
        %1441 = vmatprep.subr.mxu0 0.0
        %1442 = vmatpush1.msra.mxu0 0.0
        %1443 = vmatprep.subr.mxu0 0.0
        %1444 = vmatpush1.msra.mxu0 0.0
        %1445 = vmatprep.subr.mxu0 0.0
        %1446 = vmatpush1.msra.mxu0 0.0
        %1447 = vmatprep.subr.mxu0 0.0
        %1448 = vmatpush1.msra.mxu0 0.0
        %1449 = vmatprep.subr.mxu0 0.0
        %1450 = vmatpush1.msra.mxu0 0.0
        %1451 = vmatprep.subr.mxu0 0.0
        %1452 = vmatpush1.msra.mxu0 0.0
        %1453 = vmatprep.subr.mxu0 0.0
        %1454 = vmatpush1.msra.mxu0 0.0
        %1455 = vmatprep.subr.mxu0 0.0
        %1456 = vmatpush1.msra.mxu0 0.0
        %1457 = vmatprep.subr.mxu0 0.0
        %1458 = vmatpush1.msra.mxu0 0.0
        %1459 = vmatprep.subr.mxu0 0.0
        %1460 = vmatpush1.msra.mxu0 0.0
        %1461 = vmatprep.subr.mxu0 0.0
        %1462 = vmatpush1.msra.mxu0 0.0
        %1463 = vmatprep.subr.mxu0 0.0
        %1464 = vmatpush1.msra.mxu0 0.0
        %1465 = vmatprep.mubr.f32.mxu0 0.0
        %1466 = vmatmul.mubr.f32.gmra.mrb[0].mxu0 %v1301
        %v1467 = vpop.f32.mrb[0].mxu0
        %v1468 = vadd.f32 %v1283, %v1467
        %v1469 = vpop.f32.mrb[0].mxu0
        %v1470 = vadd.f32 %v1283, %v1469
        %1471 = vmatprep.mubr.f32.mxu0 0.0
        %1472 = vmatmul.mubr.f32.gmra.mrb[0].mxu0 %v1304
        %v1473 = vpop.f32.mrb[0].mxu0
        %v1474 = vadd.f32 %v1288, %v1473
        %v1475 = vpop.f32.mrb[0].mxu0
        %v1476 = vadd.f32 %v1288, %v1475
        %1477 = vmatprep.mubr.f32.mxu0 0.0
        %1478 = vmatmul.mubr.f32.gmra.mrb[0].mxu0 %v1307
        %v1479 = vpop.f32.mrb[0].mxu0
        %v1480 = vadd.f32 %v1293, %v1479
        %v1481 = vpop.f32.mrb[0].mxu0
        %v1482 = vadd.f32 %v1293, %v1481
        %1483 = vmatprep.mubr.f32.mxu0 0.0
        %1484 = vmatmul.mubr.f32.gmra.mrb[0].mxu0 %v1310
        %v1485 = vpop.f32.mrb[0].mxu0
        %v1486 = vadd.f32 %v1298, %v1485
        %v1487 = vpop.f32.mrb[0].mxu0
        %v1488 = vadd.f32 %v1298, %v1487
        %1489 = vdwg.mxu0
        %1490 = vmatprep.subr.mxu0 %v1213
        %1491 = vmatpush1.msra.mxu0 %v1212
        %1492 = vmatprep.subr.mxu0 %v1229
        %1493 = vmatpush1.msra.mxu0 %v1228
        %1494 = vmatprep.subr.mxu0 %v1245
        %1495 = vmatpush1.msra.mxu0 %v1244
        %1496 = vmatprep.subr.mxu0 %v1261
        %1497 = vmatpush1.msra.mxu0 %v1260
        %1498 = vmatprep.subr.mxu0 0.0
        %1499 = vmatpush1.msra.mxu0 0.0
        %1500 = vmatprep.subr.mxu0 0.0
        %1501 = vmatpush1.msra.mxu0 0.0
        %1502 = vmatprep.subr.mxu0 0.0
        %1503 = vmatpush1.msra.mxu0 0.0
        %1504 = vmatprep.subr.mxu0 0.0
        %1505 = vmatpush1.msra.mxu0 0.0
        %1506 = vmatprep.subr.mxu0 0.0
        %1507 = vmatpush1.msra.mxu0 0.0
        %1508 = vmatprep.subr.mxu0 0.0
        %1509 = vmatpush1.msra.mxu0 0.0
        %1510 = vmatprep.subr.mxu0 0.0
        %1511 = vmatpush1.msra.mxu0 0.0
        %1512 = vmatprep.subr.mxu0 0.0
        %1513 = vmatpush1.msra.mxu0 0.0
        %1514 = vmatprep.subr.mxu0 0.0
        %1515 = vmatpush1.msra.mxu0 0.0
        %1516 = vmatprep.subr.mxu0 0.0
        %1517 = vmatpush1.msra.mxu0 0.0
        %1518 = vmatprep.subr.mxu0 0.0
        %1519 = vmatpush1.msra.mxu0 0.0
        %1520 = vmatprep.subr.mxu0 0.0
        %1521 = vmatpush1.msra.mxu0 0.0
        %1522 = vmatprep.subr.mxu0 0.0
        %1523 = vmatpush1.msra.mxu0 0.0
        %1524 = vmatprep.subr.mxu0 0.0
        %1525 = vmatpush1.msra.mxu0 0.0
        %1526 = vmatprep.subr.mxu0 0.0
        %1527 = vmatpush1.msra.mxu0 0.0
        %1528 = vmatprep.subr.mxu0 0.0
        %1529 = vmatpush1.msra.mxu0 0.0
        %1530 = vmatprep.subr.mxu0 0.0
        %1531 = vmatpush1.msra.mxu0 0.0
        %1532 = vmatprep.subr.mxu0 0.0
        %1533 = vmatpush1.msra.mxu0 0.0
        %1534 = vmatprep.subr.mxu0 0.0
        %1535 = vmatpush1.msra.mxu0 0.0
        %1536 = vmatprep.subr.mxu0 0.0
        %1537 = vmatpush1.msra.mxu0 0.0
        %1538 = vmatprep.subr.mxu0 0.0
        %1539 = vmatpush1.msra.mxu0 0.0
        %1540 = vmatprep.subr.mxu0 0.0
        %1541 = vmatpush1.msra.mxu0 0.0
        %1542 = vmatprep.subr.mxu0 0.0
        %1543 = vmatpush1.msra.mxu0 0.0
        %1544 = vmatprep.subr.mxu0 0.0
        %1545 = vmatpush1.msra.mxu0 0.0
        %1546 = vmatprep.subr.mxu0 0.0
        %1547 = vmatpush1.msra.mxu0 0.0
        %1548 = vmatprep.subr.mxu0 0.0
        %1549 = vmatpush1.msra.mxu0 0.0
        %1550 = vmatprep.subr.mxu0 0.0
        %1551 = vmatpush1.msra.mxu0 0.0
        %1552 = vmatprep.subr.mxu0 0.0
        %1553 = vmatpush1.msra.mxu0 0.0
        %1554 = vmatprep.mubr.f32.mxu0 0.0
        %1555 = vmatmul.mubr.f32.gmra.mrb[0].mxu0 %v1301
        %v1556 = vpop.f32.mrb[0].mxu0
        %v1557 = vadd.f32 %v1283, %v1556
        %v1558 = vpop.f32.mrb[0].mxu0
        %v1559 = vadd.f32 %v1283, %v1558
        %1560 = vmatprep.mubr.f32.mxu0 0.0
        %1561 = vmatmul.mubr.f32.gmra.mrb[0].mxu0 %v1304
        %v1562 = vpop.f32.mrb[0].mxu0
        %v1563 = vadd.f32 %v1288, %v1562
        %v1564 = vpop.f32.mrb[0].mxu0
        %v1565 = vadd.f32 %v1288, %v1564
        %1566 = vmatprep.mubr.f32.mxu0 0.0
        %1567 = vmatmul.mubr.f32.gmra.mrb[0].mxu0 %v1307
        %v1568 = vpop.f32.mrb[0].mxu0
        %v1569 = vadd.f32 %v1293, %v1568
        %v1570 = vpop.f32.mrb[0].mxu0
        %v1571 = vadd.f32 %v1293, %v1570
        %1572 = vmatprep.mubr.f32.mxu0 0.0
        %1573 = vmatmul.mubr.f32.gmra.mrb[0].mxu0 %v1310
        %v1574 = vpop.f32.mrb[0].mxu0
        %v1575 = vadd.f32 %v1298, %v1574
        %v1576 = vpop.f32.mrb[0].mxu0
        %v1577 = vadd.f32 %v1298, %v1576
        %1578 = vdwg.mxu0
        %1579 = vmatprep.subr.mxu0 %v1215
        %1580 = vmatpush1.msra.mxu0 %v1214
        %1581 = vmatprep.subr.mxu0 %v1231
        %1582 = vmatpush1.msra.mxu0 %v1230
        %1583 = vmatprep.subr.mxu0 %v1247
        %1584 = vmatpush1.msra.mxu0 %v1246
        %1585 = vmatprep.subr.mxu0 %v1263
        %1586 = vmatpush1.msra.mxu0 %v1262
        %1587 = vmatprep.subr.mxu0 0.0
        %1588 = vmatpush1.msra.mxu0 0.0
        %1589 = vmatprep.subr.mxu0 0.0
        %1590 = vmatpush1.msra.mxu0 0.0
        %1591 = vmatprep.subr.mxu0 0.0
        %1592 = vmatpush1.msra.mxu0 0.0
        %1593 = vmatprep.subr.mxu0 0.0
        %1594 = vmatpush1.msra.mxu0 0.0
        %1595 = vmatprep.subr.mxu0 0.0
        %1596 = vmatpush1.msra.mxu0 0.0
        %1597 = vmatprep.subr.mxu0 0.0
        %1598 = vmatpush1.msra.mxu0 0.0
        %1599 = vmatprep.subr.mxu0 0.0
        %1600 = vmatpush1.msra.mxu0 0.0
        %1601 = vmatprep.subr.mxu0 0.0
        %1602 = vmatpush1.msra.mxu0 0.0
        %1603 = vmatprep.subr.mxu0 0.0
        %1604 = vmatpush1.msra.mxu0 0.0
        %1605 = vmatprep.subr.mxu0 0.0
        %1606 = vmatpush1.msra.mxu0 0.0
        %1607 = vmatprep.subr.mxu0 0.0
        %1608 = vmatpush1.msra.mxu0 0.0
        %1609 = vmatprep.subr.mxu0 0.0
        %1610 = vmatpush1.msra.mxu0 0.0
        %1611 = vmatprep.subr.mxu0 0.0
        %1612 = vmatpush1.msra.mxu0 0.0
        %1613 = vmatprep.subr.mxu0 0.0
        %1614 = vmatpush1.msra.mxu0 0.0
        %1615 = vmatprep.subr.mxu0 0.0
        %1616 = vmatpush1.msra.mxu0 0.0
        %1617 = vmatprep.subr.mxu0 0.0
        %1618 = vmatpush1.msra.mxu0 0.0
        %1619 = vmatprep.subr.mxu0 0.0
        %1620 = vmatpush1.msra.mxu0 0.0
        %1621 = vmatprep.subr.mxu0 0.0
        %1622 = vmatpush1.msra.mxu0 0.0
        %1623 = vmatprep.subr.mxu0 0.0
        %1624 = vmatpush1.msra.mxu0 0.0
        %1625 = vmatprep.subr.mxu0 0.0
        %1626 = vmatpush1.msra.mxu0 0.0
        %1627 = vmatprep.subr.mxu0 0.0
        %1628 = vmatpush1.msra.mxu0 0.0
        %1629 = vmatprep.subr.mxu0 0.0
        %1630 = vmatpush1.msra.mxu0 0.0
        %1631 = vmatprep.subr.mxu0 0.0
        %1632 = vmatpush1.msra.mxu0 0.0
        %1633 = vmatprep.subr.mxu0 0.0
        %1634 = vmatpush1.msra.mxu0 0.0
        %1635 = vmatprep.subr.mxu0 0.0
        %1636 = vmatpush1.msra.mxu0 0.0
        %1637 = vmatprep.subr.mxu0 0.0
        %1638 = vmatpush1.msra.mxu0 0.0
        %1639 = vmatprep.subr.mxu0 0.0
        %1640 = vmatpush1.msra.mxu0 0.0
        %1641 = vmatprep.subr.mxu0 0.0
        %1642 = vmatpush1.msra.mxu0 0.0
        %1643 = vmatprep.mubr.f32.mxu0 0.0
        %1644 = vmatmul.mubr.f32.gmra.mrb[0].mxu0 %v1301
        %v1645 = vpop.f32.mrb[0].mxu0
        %v1646 = vadd.f32 %v1283, %v1645
        %v1647 = vpop.f32.mrb[0].mxu0
        %v1648 = vadd.f32 %v1283, %v1647
        %1649 = vmatprep.mubr.f32.mxu0 0.0
        %1650 = vmatmul.mubr.f32.gmra.mrb[0].mxu0 %v1304
        %v1651 = vpop.f32.mrb[0].mxu0
        %v1652 = vadd.f32 %v1288, %v1651
        %v1653 = vpop.f32.mrb[0].mxu0
        %v1654 = vadd.f32 %v1288, %v1653
        %1655 = vmatprep.mubr.f32.mxu0 0.0
        %1656 = vmatmul.mubr.f32.gmra.mrb[0].mxu0 %v1307
        %v1657 = vpop.f32.mrb[0].mxu0
        %v1658 = vadd.f32 %v1293, %v1657
        %v1659 = vpop.f32.mrb[0].mxu0
        %v1660 = vadd.f32 %v1293, %v1659
        %1661 = vmatprep.mubr.f32.mxu0 0.0
        %1662 = vmatmul.mubr.f32.gmra.mrb[0].mxu0 %v1310
        %v1663 = vpop.f32.mrb[0].mxu0
        %v1664 = vadd.f32 %v1298, %v1663
        %v1665 = vpop.f32.mrb[0].mxu0
        %v1666 = vadd.f32 %v1298, %v1665
        %1667 = vdwg.mxu0
        %1668 = vmatprep.subr.mxu0 %v1217
        %1669 = vmatpush1.msra.mxu0 %v1216
        %1670 = vmatprep.subr.mxu0 %v1233
        %1671 = vmatpush1.msra.mxu0 %v1232
        %1672 = vmatprep.subr.mxu0 %v1249
        %1673 = vmatpush1.msra.mxu0 %v1248
        %1674 = vmatprep.subr.mxu0 %v1265
        %1675 = vmatpush1.msra.mxu0 %v1264
        %1676 = vmatprep.subr.mxu0 0.0
        %1677 = vmatpush1.msra.mxu0 0.0
        %1678 = vmatprep.subr.mxu0 0.0
        %1679 = vmatpush1.msra.mxu0 0.0
        %1680 = vmatprep.subr.mxu0 0.0
        %1681 = vmatpush1.msra.mxu0 0.0
        %1682 = vmatprep.subr.mxu0 0.0
        %1683 = vmatpush1.msra.mxu0 0.0
        %1684 = vmatprep.subr.mxu0 0.0
        %1685 = vmatpush1.msra.mxu0 0.0
        %1686 = vmatprep.subr.mxu0 0.0
        %1687 = vmatpush1.msra.mxu0 0.0
        %1688 = vmatprep.subr.mxu0 0.0
        %1689 = vmatpush1.msra.mxu0 0.0
        %1690 = vmatprep.subr.mxu0 0.0
        %1691 = vmatpush1.msra.mxu0 0.0
        %1692 = vmatprep.subr.mxu0 0.0
        %1693 = vmatpush1.msra.mxu0 0.0
        %1694 = vmatprep.subr.mxu0 0.0
        %1695 = vmatpush1.msra.mxu0 0.0
        %1696 = vmatprep.subr.mxu0 0.0
        %1697 = vmatpush1.msra.mxu0 0.0
        %1698 = vmatprep.subr.mxu0 0.0
        %1699 = vmatpush1.msra.mxu0 0.0
        %1700 = vmatprep.subr.mxu0 0.0
        %1701 = vmatpush1.msra.mxu0 0.0
        %1702 = vmatprep.subr.mxu0 0.0
        %1703 = vmatpush1.msra.mxu0 0.0
        %1704 = vmatprep.subr.mxu0 0.0
        %1705 = vmatpush1.msra.mxu0 0.0
        %1706 = vmatprep.subr.mxu0 0.0
        %1707 = vmatpush1.msra.mxu0 0.0
        %1708 = vmatprep.subr.mxu0 0.0
        %1709 = vmatpush1.msra.mxu0 0.0
        %1710 = vmatprep.subr.mxu0 0.0
        %1711 = vmatpush1.msra.mxu0 0.0
        %1712 = vmatprep.subr.mxu0 0.0
        %1713 = vmatpush1.msra.mxu0 0.0
        %1714 = vmatprep.subr.mxu0 0.0
        %1715 = vmatpush1.msra.mxu0 0.0
        %1716 = vmatprep.subr.mxu0 0.0
        %1717 = vmatpush1.msra.mxu0 0.0
        %1718 = vmatprep.subr.mxu0 0.0
        %1719 = vmatpush1.msra.mxu0 0.0
        %1720 = vmatprep.subr.mxu0 0.0
        %1721 = vmatpush1.msra.mxu0 0.0
        %1722 = vmatprep.subr.mxu0 0.0
        %1723 = vmatpush1.msra.mxu0 0.0
        %1724 = vmatprep.subr.mxu0 0.0
        %1725 = vmatpush1.msra.mxu0 0.0
        %1726 = vmatprep.subr.mxu0 0.0
        %1727 = vmatpush1.msra.mxu0 0.0
        %1728 = vmatprep.subr.mxu0 0.0
        %1729 = vmatpush1.msra.mxu0 0.0
        %1730 = vmatprep.subr.mxu0 0.0
        %1731 = vmatpush1.msra.mxu0 0.0
        %1732 = vmatprep.mubr.f32.mxu0 0.0
        %1733 = vmatmul.mubr.f32.gmra.mrb[0].mxu0 %v1301
        %v1734 = vpop.f32.mrb[0].mxu0
        %v1735 = vadd.f32 %v1283, %v1734
        %v1736 = vpop.f32.mrb[0].mxu0
        %v1737 = vadd.f32 %v1283, %v1736
        %1738 = vmatprep.mubr.f32.mxu0 0.0
        %1739 = vmatmul.mubr.f32.gmra.mrb[0].mxu0 %v1304
        %v1740 = vpop.f32.mrb[0].mxu0
        %v1741 = vadd.f32 %v1288, %v1740
        %v1742 = vpop.f32.mrb[0].mxu0
        %v1743 = vadd.f32 %v1288, %v1742
        %1744 = vmatprep.mubr.f32.mxu0 0.0
        %1745 = vmatmul.mubr.f32.gmra.mrb[0].mxu0 %v1307
        %v1746 = vpop.f32.mrb[0].mxu0
        %v1747 = vadd.f32 %v1293, %v1746
        %v1748 = vpop.f32.mrb[0].mxu0
        %v1749 = vadd.f32 %v1293, %v1748
        %1750 = vmatprep.mubr.f32.mxu0 0.0
        %1751 = vmatmul.mubr.f32.gmra.mrb[0].mxu0 %v1310
        %v1752 = vpop.f32.mrb[0].mxu0
        %v1753 = vadd.f32 %v1298, %v1752
        %v1754 = vpop.f32.mrb[0].mxu0
        %v1755 = vadd.f32 %v1298, %v1754
        %1756 = vdwg.mxu0
        %1757 = vmatprep.subr.mxu0 %v1219
        %1758 = vmatpush1.msra.mxu0 %v1218
        %1759 = vmatprep.subr.mxu0 %v1235
        %1760 = vmatpush1.msra.mxu0 %v1234
        %1761 = vmatprep.subr.mxu0 %v1251
        %1762 = vmatpush1.msra.mxu0 %v1250
        %1763 = vmatprep.subr.mxu0 %v1267
        %1764 = vmatpush1.msra.mxu0 %v1266
        %1765 = vmatprep.subr.mxu0 0.0
        %1766 = vmatpush1.msra.mxu0 0.0
        %1767 = vmatprep.subr.mxu0 0.0
        %1768 = vmatpush1.msra.mxu0 0.0
        %1769 = vmatprep.subr.mxu0 0.0
        %1770 = vmatpush1.msra.mxu0 0.0
        %1771 = vmatprep.subr.mxu0 0.0
        %1772 = vmatpush1.msra.mxu0 0.0
        %1773 = vmatprep.subr.mxu0 0.0
        %1774 = vmatpush1.msra.mxu0 0.0
        %1775 = vmatprep.subr.mxu0 0.0
        %1776 = vmatpush1.msra.mxu0 0.0
        %1777 = vmatprep.subr.mxu0 0.0
        %1778 = vmatpush1.msra.mxu0 0.0
        %1779 = vmatprep.subr.mxu0 0.0
        %1780 = vmatpush1.msra.mxu0 0.0
        %1781 = vmatprep.subr.mxu0 0.0
        %1782 = vmatpush1.msra.mxu0 0.0
        %1783 = vmatprep.subr.mxu0 0.0
        %1784 = vmatpush1.msra.mxu0 0.0
        %1785 = vmatprep.subr.mxu0 0.0
        %1786 = vmatpush1.msra.mxu0 0.0
        %1787 = vmatprep.subr.mxu0 0.0
        %1788 = vmatpush1.msra.mxu0 0.0
        %1789 = vmatprep.subr.mxu0 0.0
        %1790 = vmatpush1.msra.mxu0 0.0
        %1791 = vmatprep.subr.mxu0 0.0
        %1792 = vmatpush1.msra.mxu0 0.0
        %1793 = vmatprep.subr.mxu0 0.0
        %1794 = vmatpush1.msra.mxu0 0.0
        %1795 = vmatprep.subr.mxu0 0.0
        %1796 = vmatpush1.msra.mxu0 0.0
        %1797 = vmatprep.subr.mxu0 0.0
        %1798 = vmatpush1.msra.mxu0 0.0
        %1799 = vmatprep.subr.mxu0 0.0
        %1800 = vmatpush1.msra.mxu0 0.0
        %1801 = vmatprep.subr.mxu0 0.0
        %1802 = vmatpush1.msra.mxu0 0.0
        %1803 = vmatprep.subr.mxu0 0.0
        %1804 = vmatpush1.msra.mxu0 0.0
        %1805 = vmatprep.subr.mxu0 0.0
        %1806 = vmatpush1.msra.mxu0 0.0
        %1807 = vmatprep.subr.mxu0 0.0
        %1808 = vmatpush1.msra.mxu0 0.0
        %1809 = vmatprep.subr.mxu0 0.0
        %1810 = vmatpush1.msra.mxu0 0.0
        %1811 = vmatprep.subr.mxu0 0.0
        %1812 = vmatpush1.msra.mxu0 0.0
        %1813 = vmatprep.subr.mxu0 0.0
        %1814 = vmatpush1.msra.mxu0 0.0
        %1815 = vmatprep.subr.mxu0 0.0
        %1816 = vmatpush1.msra.mxu0 0.0
        %1817 = vmatprep.subr.mxu0 0.0
        %1818 = vmatpush1.msra.mxu0 0.0
        %1819 = vmatprep.subr.mxu0 0.0
        %1820 = vmatpush1.msra.mxu0 0.0
        %1821 = vmatprep.mubr.f32.mxu0 0.0
        %1822 = vmatmul.mubr.f32.gmra.mrb[0].mxu0 %v1301
        %v1823 = vpop.f32.mrb[0].mxu0
        %v1824 = vadd.f32 %v1283, %v1823
        %v1825 = vpop.f32.mrb[0].mxu0
        %v1826 = vadd.f32 %v1283, %v1825
        %1827 = vmatprep.mubr.f32.mxu0 0.0
        %1828 = vmatmul.mubr.f32.gmra.mrb[0].mxu0 %v1304
        %v1829 = vpop.f32.mrb[0].mxu0
        %v1830 = vadd.f32 %v1288, %v1829
        %v1831 = vpop.f32.mrb[0].mxu0
        %v1832 = vadd.f32 %v1288, %v1831
        %1833 = vmatprep.mubr.f32.mxu0 0.0
        %1834 = vmatmul.mubr.f32.gmra.mrb[0].mxu0 %v1307
        %v1835 = vpop.f32.mrb[0].mxu0
        %v1836 = vadd.f32 %v1293, %v1835
        %v1837 = vpop.f32.mrb[0].mxu0
        %v1838 = vadd.f32 %v1293, %v1837
        %1839 = vmatprep.mubr.f32.mxu0 0.0
        %1840 = vmatmul.mubr.f32.gmra.mrb[0].mxu0 %v1310
        %v1841 = vpop.f32.mrb[0].mxu0
        %v1842 = vadd.f32 %v1298, %v1841
        %v1843 = vpop.f32.mrb[0].mxu0
        %v1844 = vadd.f32 %v1298, %v1843
        %1845 = vdwg.mxu0
        %1846 = vmatprep.subr.mxu0 %v1221
        %1847 = vmatpush1.msra.mxu0 %v1220
        %1848 = vmatprep.subr.mxu0 %v1237
        %1849 = vmatpush1.msra.mxu0 %v1236
        %1850 = vmatprep.subr.mxu0 %v1253
        %1851 = vmatpush1.msra.mxu0 %v1252
        %1852 = vmatprep.subr.mxu0 %v1269
        %1853 = vmatpush1.msra.mxu0 %v1268
        %1854 = vmatprep.subr.mxu0 0.0
        %1855 = vmatpush1.msra.mxu0 0.0
        %1856 = vmatprep.subr.mxu0 0.0
        %1857 = vmatpush1.msra.mxu0 0.0
        %1858 = vmatprep.subr.mxu0 0.0
        %1859 = vmatpush1.msra.mxu0 0.0
        %1860 = vmatprep.subr.mxu0 0.0
        %1861 = vmatpush1.msra.mxu0 0.0
        %1862 = vmatprep.subr.mxu0 0.0
        %1863 = vmatpush1.msra.mxu0 0.0
        %1864 = vmatprep.subr.mxu0 0.0
        %1865 = vmatpush1.msra.mxu0 0.0
        %1866 = vmatprep.subr.mxu0 0.0
        %1867 = vmatpush1.msra.mxu0 0.0
        %1868 = vmatprep.subr.mxu0 0.0
        %1869 = vmatpush1.msra.mxu0 0.0
        %1870 = vmatprep.subr.mxu0 0.0
        %1871 = vmatpush1.msra.mxu0 0.0
        %1872 = vmatprep.subr.mxu0 0.0
        %1873 = vmatpush1.msra.mxu0 0.0
        %1874 = vmatprep.subr.mxu0 0.0
        %1875 = vmatpush1.msra.mxu0 0.0
        %1876 = vmatprep.subr.mxu0 0.0
        %1877 = vmatpush1.msra.mxu0 0.0
        %1878 = vmatprep.subr.mxu0 0.0
        %1879 = vmatpush1.msra.mxu0 0.0
        %1880 = vmatprep.subr.mxu0 0.0
        %1881 = vmatpush1.msra.mxu0 0.0
        %1882 = vmatprep.subr.mxu0 0.0
        %1883 = vmatpush1.msra.mxu0 0.0
        %1884 = vmatprep.subr.mxu0 0.0
        %1885 = vmatpush1.msra.mxu0 0.0
        %1886 = vmatprep.subr.mxu0 0.0
        %1887 = vmatpush1.msra.mxu0 0.0
        %1888 = vmatprep.subr.mxu0 0.0
        %1889 = vmatpush1.msra.mxu0 0.0
        %1890 = vmatprep.subr.mxu0 0.0
        %1891 = vmatpush1.msra.mxu0 0.0
        %1892 = vmatprep.subr.mxu0 0.0
        %1893 = vmatpush1.msra.mxu0 0.0
        %1894 = vmatprep.subr.mxu0 0.0
        %1895 = vmatpush1.msra.mxu0 0.0
        %1896 = vmatprep.subr.mxu0 0.0
        %1897 = vmatpush1.msra.mxu0 0.0
        %1898 = vmatprep.subr.mxu0 0.0
        %1899 = vmatpush1.msra.mxu0 0.0
        %1900 = vmatprep.subr.mxu0 0.0
        %1901 = vmatpush1.msra.mxu0 0.0
        %1902 = vmatprep.subr.mxu0 0.0
        %1903 = vmatpush1.msra.mxu0 0.0
        %1904 = vmatprep.subr.mxu0 0.0
        %1905 = vmatpush1.msra.mxu0 0.0
        %1906 = vmatprep.subr.mxu0 0.0
        %1907 = vmatpush1.msra.mxu0 0.0
        %1908 = vmatprep.subr.mxu0 0.0
        %1909 = vmatpush1.msra.mxu0 0.0
        %1910 = vmatprep.mubr.f32.mxu0 0.0
        %1911 = vmatmul.mubr.f32.gmra.mrb[0].mxu0 %v1301
        %v1912 = vpop.f32.mrb[0].mxu0
        %v1913 = vadd.f32 %v1283, %v1912
        %v1914 = vpop.f32.mrb[0].mxu0
        %v1915 = vadd.f32 %v1283, %v1914
        %1916 = vmatprep.mubr.f32.mxu0 0.0
        %1917 = vmatmul.mubr.f32.gmra.mrb[0].mxu0 %v1304
        %v1918 = vpop.f32.mrb[0].mxu0
        %v1919 = vadd.f32 %v1288, %v1918
        %v1920 = vpop.f32.mrb[0].mxu0
        %v1921 = vadd.f32 %v1288, %v1920
        %1922 = vmatprep.mubr.f32.mxu0 0.0
        %1923 = vmatmul.mubr.f32.gmra.mrb[0].mxu0 %v1307
        %v1924 = vpop.f32.mrb[0].mxu0
        %v1925 = vadd.f32 %v1293, %v1924
        %v1926 = vpop.f32.mrb[0].mxu0
        %v1927 = vadd.f32 %v1293, %v1926
        %1928 = vmatprep.mubr.f32.mxu0 0.0
        %1929 = vmatmul.mubr.f32.gmra.mrb[0].mxu0 %v1310
        %v1930 = vpop.f32.mrb[0].mxu0
        %v1931 = vadd.f32 %v1298, %v1930
        %v1932 = vpop.f32.mrb[0].mxu0
        %v1933 = vadd.f32 %v1298, %v1932
        %1934 = vdwg.mxu0
        %1935 = vmatprep.subr.mxu0 %v1223
        %1936 = vmatpush1.msra.mxu0 %v1222
        %1937 = vmatprep.subr.mxu0 %v1239
        %1938 = vmatpush1.msra.mxu0 %v1238
        %1939 = vmatprep.subr.mxu0 %v1255
        %1940 = vmatpush1.msra.mxu0 %v1254
        %1941 = vmatprep.subr.mxu0 %v1271
        %1942 = vmatpush1.msra.mxu0 %v1270
        %1943 = vmatprep.subr.mxu0 0.0
        %1944 = vmatpush1.msra.mxu0 0.0
        %1945 = vmatprep.subr.mxu0 0.0
        %1946 = vmatpush1.msra.mxu0 0.0
        %1947 = vmatprep.subr.mxu0 0.0
        %1948 = vmatpush1.msra.mxu0 0.0
        %1949 = vmatprep.subr.mxu0 0.0
        %1950 = vmatpush1.msra.mxu0 0.0
        %1951 = vmatprep.subr.mxu0 0.0
        %1952 = vmatpush1.msra.mxu0 0.0
        %1953 = vmatprep.subr.mxu0 0.0
        %1954 = vmatpush1.msra.mxu0 0.0
        %1955 = vmatprep.subr.mxu0 0.0
        %1956 = vmatpush1.msra.mxu0 0.0
        %1957 = vmatprep.subr.mxu0 0.0
        %1958 = vmatpush1.msra.mxu0 0.0
        %1959 = vmatprep.subr.mxu0 0.0
        %1960 = vmatpush1.msra.mxu0 0.0
        %1961 = vmatprep.subr.mxu0 0.0
        %1962 = vmatpush1.msra.mxu0 0.0
        %1963 = vmatprep.subr.mxu0 0.0
        %1964 = vmatpush1.msra.mxu0 0.0
        %1965 = vmatprep.subr.mxu0 0.0
        %1966 = vmatpush1.msra.mxu0 0.0
        %1967 = vmatprep.subr.mxu0 0.0
        %1968 = vmatpush1.msra.mxu0 0.0
        %1969 = vmatprep.subr.mxu0 0.0
        %1970 = vmatpush1.msra.mxu0 0.0
        %1971 = vmatprep.subr.mxu0 0.0
        %1972 = vmatpush1.msra.mxu0 0.0
        %1973 = vmatprep.subr.mxu0 0.0
        %1974 = vmatpush1.msra.mxu0 0.0
        %1975 = vmatprep.subr.mxu0 0.0
        %1976 = vmatpush1.msra.mxu0 0.0
        %1977 = vmatprep.subr.mxu0 0.0
        %1978 = vmatpush1.msra.mxu0 0.0
        %1979 = vmatprep.subr.mxu0 0.0
        %1980 = vmatpush1.msra.mxu0 0.0
        %1981 = vmatprep.subr.mxu0 0.0
        %1982 = vmatpush1.msra.mxu0 0.0
        %1983 = vmatprep.subr.mxu0 0.0
        %1984 = vmatpush1.msra.mxu0 0.0
        %1985 = vmatprep.subr.mxu0 0.0
        %1986 = vmatpush1.msra.mxu0 0.0
        %1987 = vmatprep.subr.mxu0 0.0
        %1988 = vmatpush1.msra.mxu0 0.0
        %1989 = vmatprep.subr.mxu0 0.0
        %1990 = vmatpush1.msra.mxu0 0.0
        %1991 = vmatprep.subr.mxu0 0.0
        %1992 = vmatpush1.msra.mxu0 0.0
        %1993 = vmatprep.subr.mxu0 0.0
        %1994 = vmatpush1.msra.mxu0 0.0
        %1995 = vmatprep.subr.mxu0 0.0
        %1996 = vmatpush1.msra.mxu0 0.0
        %1997 = vmatprep.subr.mxu0 0.0
        %1998 = vmatpush1.msra.mxu0 0.0
        %1999 = vmatprep.mubr.f32.mxu0 0.0
        %2000 = vmatmul.mubr.f32.gmra.mrb[0].mxu0 %v1301
        %v2001 = vpop.f32.mrb[0].mxu0
        %v2002 = vadd.f32 %v1283, %v2001
        %v2003 = vpop.f32.mrb[0].mxu0
        %v2004 = vadd.f32 %v1283, %v2003
        %2005 = vmatprep.mubr.f32.mxu0 0.0
        %2006 = vmatmul.mubr.f32.gmra.mrb[0].mxu0 %v1304
        %v2007 = vpop.f32.mrb[0].mxu0
        %v2008 = vadd.f32 %v1288, %v2007
        %v2009 = vpop.f32.mrb[0].mxu0
        %v2010 = vadd.f32 %v1288, %v2009
        %2011 = vmatprep.mubr.f32.mxu0 0.0
        %2012 = vmatmul.mubr.f32.gmra.mrb[0].mxu0 %v1307
        %v2013 = vpop.f32.mrb[0].mxu0
        %v2014 = vadd.f32 %v1293, %v2013
        %v2015 = vpop.f32.mrb[0].mxu0
        %v2016 = vadd.f32 %v1293, %v2015
        %2017 = vmatprep.mubr.f32.mxu0 0.0
        %2018 = vmatmul.mubr.f32.gmra.mrb[0].mxu0 %v1310
        %v2019 = vpop.f32.mrb[0].mxu0
        %v2020 = vadd.f32 %v1298, %v2019
        %v2021 = vpop.f32.mrb[0].mxu0
        %v2022 = vadd.f32 %v1298, %v2021
        %2023 = vdwg.mxu0
        %v2024 = vadd.f32 %v1379, %v263
        %v2025 = vadd.f32 %v1381, %v264
        %v2026 = vadd.f32 %v1468, %v265
        %v2027 = vadd.f32 %v1470, %v266
        %v2028 = vadd.f32 %v1557, %v267
        %v2029 = vadd.f32 %v1559, %v268
        %v2030 = vadd.f32 %v1646, %v269
        %v2031 = vadd.f32 %v1648, %v270
        %v2032 = vadd.f32 %v1735, %v271
        %v2033 = vadd.f32 %v1737, %v272
        %v2034 = vadd.f32 %v1824, %v273
        %v2035 = vadd.f32 %v1826, %v274
        %v2036 = vadd.f32 %v1913, %v275
        %v2037 = vadd.f32 %v1915, %v276
        %v2038 = vadd.f32 %v2002, %v277
        %v2039 = vadd.f32 %v2004, %v278
        %v2040 = vadd.f32 %v1385, %v279
        %v2041 = vadd.f32 %v1387, %v280
        %v2042 = vadd.f32 %v1474, %v281
        %v2043 = vadd.f32 %v1476, %v282
        %v2044 = vadd.f32 %v1563, %v283
        %v2045 = vadd.f32 %v1565, %v284
        %v2046 = vadd.f32 %v1652, %v285
        %v2047 = vadd.f32 %v1654, %v286
        %v2048 = vadd.f32 %v1741, %v287
        %v2049 = vadd.f32 %v1743, %v288
        %v2050 = vadd.f32 %v1830, %v289
        %v2051 = vadd.f32 %v1832, %v290
        %v2052 = vadd.f32 %v1919, %v291
        %v2053 = vadd.f32 %v1921, %v292
        %v2054 = vadd.f32 %v2008, %v293
        %v2055 = vadd.f32 %v2010, %v294
        %v2056 = vadd.f32 %v1391, %v295
        %v2057 = vadd.f32 %v1393, %v296
        %v2058 = vadd.f32 %v1480, %v297
        %v2059 = vadd.f32 %v1482, %v298
        %v2060 = vadd.f32 %v1569, %v299
        %v2061 = vadd.f32 %v1571, %v300
        %v2062 = vadd.f32 %v1658, %v301
        %v2063 = vadd.f32 %v1660, %v302
        %v2064 = vadd.f32 %v1747, %v303
        %v2065 = vadd.f32 %v1749, %v304
        %v2066 = vadd.f32 %v1836, %v305
        %v2067 = vadd.f32 %v1838, %v306
        %v2068 = vadd.f32 %v1925, %v307
        %v2069 = vadd.f32 %v1927, %v308
        %v2070 = vadd.f32 %v2014, %v309
        %v2071 = vadd.f32 %v2016, %v310
        %v2072 = vadd.f32 %v1397, %v311
        %v2073 = vadd.f32 %v1399, %v312
        %v2074 = vadd.f32 %v1486, %v313
        %v2075 = vadd.f32 %v1488, %v314
        %v2076 = vadd.f32 %v1575, %v315
        %v2077 = vadd.f32 %v1577, %v316
        %v2078 = vadd.f32 %v1664, %v317
        %v2079 = vadd.f32 %v1666, %v318
        %v2080 = vadd.f32 %v1753, %v319
        %v2081 = vadd.f32 %v1755, %v320
        %v2082 = vadd.f32 %v1842, %v321
        %v2083 = vadd.f32 %v1844, %v322
        %v2084 = vadd.f32 %v1931, %v323
        %v2085 = vadd.f32 %v1933, %v324
        %v2086 = vadd.f32 %v2020, %v325
        %v2087 = vadd.f32 %v2022, %v326
        %vm2088 = vcmp.gt.f32.partialorder %v2024, 0.0
        %vm2089 = vcmp.gt.f32.partialorder %v2025, 0.0
        %vm2090 = vcmp.gt.f32.partialorder %v2026, 0.0
        %vm2091 = vcmp.gt.f32.partialorder %v2027, 0.0
        %vm2092 = vcmp.gt.f32.partialorder %v2028, 0.0
        %vm2093 = vcmp.gt.f32.partialorder %v2029, 0.0
        %vm2094 = vcmp.gt.f32.partialorder %v2030, 0.0
        %vm2095 = vcmp.gt.f32.partialorder %v2031, 0.0
        %vm2096 = vcmp.gt.f32.partialorder %v2032, 0.0
        %vm2097 = vcmp.gt.f32.partialorder %v2033, 0.0
        %vm2098 = vcmp.gt.f32.partialorder %v2034, 0.0
        %vm2099 = vcmp.gt.f32.partialorder %v2035, 0.0
        %vm2100 = vcmp.gt.f32.partialorder %v2036, 0.0
        %vm2101 = vcmp.gt.f32.partialorder %v2037, 0.0
        %vm2102 = vcmp.gt.f32.partialorder %v2038, 0.0
        %vm2103 = vcmp.gt.f32.partialorder %v2039, 0.0
        %vm2104 = vcmp.gt.f32.partialorder %v2040, 0.0
        %vm2105 = vcmp.gt.f32.partialorder %v2041, 0.0
        %vm2106 = vcmp.gt.f32.partialorder %v2042, 0.0
        %vm2107 = vcmp.gt.f32.partialorder %v2043, 0.0
        %vm2108 = vcmp.gt.f32.partialorder %v2044, 0.0
        %vm2109 = vcmp.gt.f32.partialorder %v2045, 0.0
        %vm2110 = vcmp.gt.f32.partialorder %v2046, 0.0
        %vm2111 = vcmp.gt.f32.partialorder %v2047, 0.0
        %vm2112 = vcmp.gt.f32.partialorder %v2048, 0.0
        %vm2113 = vcmp.gt.f32.partialorder %v2049, 0.0
        %vm2114 = vcmp.gt.f32.partialorder %v2050, 0.0
        %vm2115 = vcmp.gt.f32.partialorder %v2051, 0.0
        %vm2116 = vcmp.gt.f32.partialorder %v2052, 0.0
        %vm2117 = vcmp.gt.f32.partialorder %v2053, 0.0
        %vm2118 = vcmp.gt.f32.partialorder %v2054, 0.0
        %vm2119 = vcmp.gt.f32.partialorder %v2055, 0.0
        %vm2120 = vcmp.gt.f32.partialorder %v2056, 0.0
        %vm2121 = vcmp.gt.f32.partialorder %v2057, 0.0
        %vm2122 = vcmp.gt.f32.partialorder %v2058, 0.0
        %vm2123 = vcmp.gt.f32.partialorder %v2059, 0.0
        %vm2124 = vcmp.gt.f32.partialorder %v2060, 0.0
        %vm2125 = vcmp.gt.f32.partialorder %v2061, 0.0
        %vm2126 = vcmp.gt.f32.partialorder %v2062, 0.0
        %vm2127 = vcmp.gt.f32.partialorder %v2063, 0.0
        %vm2128 = vcmp.gt.f32.partialorder %v2064, 0.0
        %vm2129 = vcmp.gt.f32.partialorder %v2065, 0.0
        %vm2130 = vcmp.gt.f32.partialorder %v2066, 0.0
        %vm2131 = vcmp.gt.f32.partialorder %v2067, 0.0
        %vm2132 = vcmp.gt.f32.partialorder %v2068, 0.0
        %vm2133 = vcmp.gt.f32.partialorder %v2069, 0.0
        %vm2134 = vcmp.gt.f32.partialorder %v2070, 0.0
        %vm2135 = vcmp.gt.f32.partialorder %v2071, 0.0
        %vm2136 = vcmp.gt.f32.partialorder %v2072, 0.0
        %vm2137 = vcmp.gt.f32.partialorder %v2073, 0.0
        %vm2138 = vcmp.gt.f32.partialorder %v2074, 0.0
        %vm2139 = vcmp.gt.f32.partialorder %v2075, 0.0
        %vm2140 = vcmp.gt.f32.partialorder %v2076, 0.0
        %vm2141 = vcmp.gt.f32.partialorder %v2077, 0.0
        %vm2142 = vcmp.gt.f32.partialorder %v2078, 0.0
        %vm2143 = vcmp.gt.f32.partialorder %v2079, 0.0
        %vm2144 = vcmp.gt.f32.partialorder %v2080, 0.0
        %vm2145 = vcmp.gt.f32.partialorder %v2081, 0.0
        %vm2146 = vcmp.gt.f32.partialorder %v2082, 0.0
        %vm2147 = vcmp.gt.f32.partialorder %v2083, 0.0
        %vm2148 = vcmp.gt.f32.partialorder %v2084, 0.0
        %vm2149 = vcmp.gt.f32.partialorder %v2085, 0.0
        %vm2150 = vcmp.gt.f32.partialorder %v2086, 0.0
        %vm2151 = vcmp.gt.f32.partialorder %v2087, 0.0
        %v2152 = vmul.f32 %v2024, 0.01
        %v2153 = vmul.f32 %v2025, 0.01
        %v2154 = vmul.f32 %v2026, 0.01
        %v2155 = vmul.f32 %v2027, 0.01
        %v2156 = vmul.f32 %v2028, 0.01
        %v2157 = vmul.f32 %v2029, 0.01
        %v2158 = vmul.f32 %v2030, 0.01
        %v2159 = vmul.f32 %v2031, 0.01
        %v2160 = vmul.f32 %v2032, 0.01
        %v2161 = vmul.f32 %v2033, 0.01
        %v2162 = vmul.f32 %v2034, 0.01
        %v2163 = vmul.f32 %v2035, 0.01
        %v2164 = vmul.f32 %v2036, 0.01
        %v2165 = vmul.f32 %v2037, 0.01
        %v2166 = vmul.f32 %v2038, 0.01
        %v2167 = vmul.f32 %v2039, 0.01
        %v2168 = vmul.f32 %v2040, 0.01
        %v2169 = vmul.f32 %v2041, 0.01
        %v2170 = vmul.f32 %v2042, 0.01
        %v2171 = vmul.f32 %v2043, 0.01
        %v2172 = vmul.f32 %v2044, 0.01
        %v2173 = vmul.f32 %v2045, 0.01
        %v2174 = vmul.f32 %v2046, 0.01
        %v2175 = vmul.f32 %v2047, 0.01
        %v2176 = vmul.f32 %v2048, 0.01
        %v2177 = vmul.f32 %v2049, 0.01
        %v2178 = vmul.f32 %v2050, 0.01
        %v2179 = vmul.f32 %v2051, 0.01
        %v2180 = vmul.f32 %v2052, 0.01
        %v2181 = vmul.f32 %v2053, 0.01
        %v2182 = vmul.f32 %v2054, 0.01
        %v2183 = vmul.f32 %v2055, 0.01
        %v2184 = vmul.f32 %v2056, 0.01
        %v2185 = vmul.f32 %v2057, 0.01
        %v2186 = vmul.f32 %v2058, 0.01
        %v2187 = vmul.f32 %v2059, 0.01
        %v2188 = vmul.f32 %v2060, 0.01
        %v2189 = vmul.f32 %v2061, 0.01
        %v2190 = vmul.f32 %v2062, 0.01
        %v2191 = vmul.f32 %v2063, 0.01
        %v2192 = vmul.f32 %v2064, 0.01
        %v2193 = vmul.f32 %v2065, 0.01
        %v2194 = vmul.f32 %v2066, 0.01
        %v2195 = vmul.f32 %v2067, 0.01
        %v2196 = vmul.f32 %v2068, 0.01
        %v2197 = vmul.f32 %v2069, 0.01
        %v2198 = vmul.f32 %v2070, 0.01
        %v2199 = vmul.f32 %v2071, 0.01
        %v2200 = vmul.f32 %v2072, 0.01
        %v2201 = vmul.f32 %v2073, 0.01
        %v2202 = vmul.f32 %v2074, 0.01
        %v2203 = vmul.f32 %v2075, 0.01
        %v2204 = vmul.f32 %v2076, 0.01
        %v2205 = vmul.f32 %v2077, 0.01
        %v2206 = vmul.f32 %v2078, 0.01
        %v2207 = vmul.f32 %v2079, 0.01
        %v2208 = vmul.f32 %v2080, 0.01
        %v2209 = vmul.f32 %v2081, 0.01
        %v2210 = vmul.f32 %v2082, 0.01
        %v2211 = vmul.f32 %v2083, 0.01
        %v2212 = vmul.f32 %v2084, 0.01
        %v2213 = vmul.f32 %v2085, 0.01
        %v2214 = vmul.f32 %v2086, 0.01
        %v2215 = vmul.f32 %v2087, 0.01
        %v2216 = vsel %vm2088, %v2024, %v2152
        %v2217 = vsel %vm2089, %v2025, %v2153
        %v2218 = vsel %vm2090, %v2026, %v2154
        %v2219 = vsel %vm2091, %v2027, %v2155
        %v2220 = vsel %vm2092, %v2028, %v2156
        %v2221 = vsel %vm2093, %v2029, %v2157
        %v2222 = vsel %vm2094, %v2030, %v2158
        %v2223 = vsel %vm2095, %v2031, %v2159
        %v2224 = vsel %vm2096, %v2032, %v2160
        %v2225 = vsel %vm2097, %v2033, %v2161
        %v2226 = vsel %vm2098, %v2034, %v2162
        %v2227 = vsel %vm2099, %v2035, %v2163
        %v2228 = vsel %vm2100, %v2036, %v2164
        %v2229 = vsel %vm2101, %v2037, %v2165
        %v2230 = vsel %vm2102, %v2038, %v2166
        %v2231 = vsel %vm2103, %v2039, %v2167
        %v2232 = vsel %vm2104, %v2040, %v2168
        %v2233 = vsel %vm2105, %v2041, %v2169
        %v2234 = vsel %vm2106, %v2042, %v2170
        %v2235 = vsel %vm2107, %v2043, %v2171
        %v2236 = vsel %vm2108, %v2044, %v2172
        %v2237 = vsel %vm2109, %v2045, %v2173
        %v2238 = vsel %vm2110, %v2046, %v2174
        %v2239 = vsel %vm2111, %v2047, %v2175
        %v2240 = vsel %vm2112, %v2048, %v2176
        %v2241 = vsel %vm2113, %v2049, %v2177
        %v2242 = vsel %vm2114, %v2050, %v2178
        %v2243 = vsel %vm2115, %v2051, %v2179
        %v2244 = vsel %vm2116, %v2052, %v2180
        %v2245 = vsel %vm2117, %v2053, %v2181
        %v2246 = vsel %vm2118, %v2054, %v2182
        %v2247 = vsel %vm2119, %v2055, %v2183
        %v2248 = vsel %vm2120, %v2056, %v2184
        %v2249 = vsel %vm2121, %v2057, %v2185
        %v2250 = vsel %vm2122, %v2058, %v2186
        %v2251 = vsel %vm2123, %v2059, %v2187
        %v2252 = vsel %vm2124, %v2060, %v2188
        %v2253 = vsel %vm2125, %v2061, %v2189
        %v2254 = vsel %vm2126, %v2062, %v2190
        %v2255 = vsel %vm2127, %v2063, %v2191
        %v2256 = vsel %vm2128, %v2064, %v2192
        %v2257 = vsel %vm2129, %v2065, %v2193
        %v2258 = vsel %vm2130, %v2066, %v2194
        %v2259 = vsel %vm2131, %v2067, %v2195
        %v2260 = vsel %vm2132, %v2068, %v2196
        %v2261 = vsel %vm2133, %v2069, %v2197
        %v2262 = vsel %vm2134, %v2070, %v2198
        %v2263 = vsel %vm2135, %v2071, %v2199
        %v2264 = vsel %vm2136, %v2072, %v2200
        %v2265 = vsel %vm2137, %v2073, %v2201
        %v2266 = vsel %vm2138, %v2074, %v2202
        %v2267 = vsel %vm2139, %v2075, %v2203
        %v2268 = vsel %vm2140, %v2076, %v2204
        %v2269 = vsel %vm2141, %v2077, %v2205
        %v2270 = vsel %vm2142, %v2078, %v2206
        %v2271 = vsel %vm2143, %v2079, %v2207
        %v2272 = vsel %vm2144, %v2080, %v2208
        %v2273 = vsel %vm2145, %v2081, %v2209
        %v2274 = vsel %vm2146, %v2082, %v2210
        %v2275 = vsel %vm2147, %v2083, %v2211
        %v2276 = vsel %vm2148, %v2084, %v2212
        %v2277 = vsel %vm2149, %v2085, %v2213
        %v2278 = vsel %vm2150, %v2086, %v2214
        %v2279 = vsel %vm2151, %v2087, %v2215
        %2280 = vst [vmem:[%s260] sm:$0xff] %v2216
        %2281 = vst [vmem:[%s260 + $0x8] sm:$0xff] %v2217
        %2282 = vst [vmem:[%s260 + $0x10] sm:$0xff] %v2218
        %2283 = vst [vmem:[%s260 + $0x18] sm:$0xff] %v2219
        %2284 = vst [vmem:[%s260 + $0x20] sm:$0xff] %v2220
        %2285 = vst [vmem:[%s260 + $0x28] sm:$0xff] %v2221
        %2286 = vst [vmem:[%s260 + $0x30] sm:$0xff] %v2222
        %2287 = vst [vmem:[%s260 + $0x38] sm:$0xff] %v2223
        %2288 = vst [vmem:[%s260 + $0x40] sm:$0xff] %v2224
        %2289 = vst [vmem:[%s260 + $0x48] sm:$0xff] %v2225
        %2290 = vst [vmem:[%s260 + $0x50] sm:$0xff] %v2226
        %2291 = vst [vmem:[%s260 + $0x58] sm:$0xff] %v2227
        %2292 = vst [vmem:[%s260 + $0x60] sm:$0xff] %v2228
        %2293 = vst [vmem:[%s260 + $0x68] sm:$0xff] %v2229
        %2294 = vst [vmem:[%s260 + $0x70] sm:$0xff] %v2230
        %2295 = vst [vmem:[%s260 + $0x78] sm:$0xff] %v2231
        %2296 = vst [vmem:[%s260 + $0x80] sm:$0xff] %v2232
        %2297 = vst [vmem:[%s260 + $0x88] sm:$0xff] %v2233
        %2298 = vst [vmem:[%s260 + $0x90] sm:$0xff] %v2234
        %2299 = vst [vmem:[%s260 + $0x98] sm:$0xff] %v2235
        %2300 = vst [vmem:[%s260 + $0xa0] sm:$0xff] %v2236
        %2301 = vst [vmem:[%s260 + $0xa8] sm:$0xff] %v2237
        %2302 = vst [vmem:[%s260 + $0xb0] sm:$0xff] %v2238
        %2303 = vst [vmem:[%s260 + $0xb8] sm:$0xff] %v2239
        %2304 = vst [vmem:[%s260 + $0xc0] sm:$0xff] %v2240
        %2305 = vst [vmem:[%s260 + $0xc8] sm:$0xff] %v2241
        %2306 = vst [vmem:[%s260 + $0xd0] sm:$0xff] %v2242
        %2307 = vst [vmem:[%s260 + $0xd8] sm:$0xff] %v2243
        %2308 = vst [vmem:[%s260 + $0xe0] sm:$0xff] %v2244
        %2309 = vst [vmem:[%s260 + $0xe8] sm:$0xff] %v2245
        %2310 = vst [vmem:[%s260 + $0xf0] sm:$0xff] %v2246
        %2311 = vst [vmem:[%s260 + $0xf8] sm:$0xff] %v2247
        %2312 = vst [vmem:[%s260 + $0x100] sm:$0xff] %v2248
        %2313 = vst [vmem:[%s260 + $0x108] sm:$0xff] %v2249
        %2314 = vst [vmem:[%s260 + $0x110] sm:$0xff] %v2250
        %2315 = vst [vmem:[%s260 + $0x118] sm:$0xff] %v2251
        %2316 = vst [vmem:[%s260 + $0x120] sm:$0xff] %v2252
        %2317 = vst [vmem:[%s260 + $0x128] sm:$0xff] %v2253
        %2318 = vst [vmem:[%s260 + $0x130] sm:$0xff] %v2254
        %2319 = vst [vmem:[%s260 + $0x138] sm:$0xff] %v2255
        %2320 = vst [vmem:[%s260 + $0x140] sm:$0xff] %v2256
        %2321 = vst [vmem:[%s260 + $0x148] sm:$0xff] %v2257
        %2322 = vst [vmem:[%s260 + $0x150] sm:$0xff] %v2258
        %2323 = vst [vmem:[%s260 + $0x158] sm:$0xff] %v2259
        %2324 = vst [vmem:[%s260 + $0x160] sm:$0xff] %v2260
        %2325 = vst [vmem:[%s260 + $0x168] sm:$0xff] %v2261
        %2326 = vst [vmem:[%s260 + $0x170] sm:$0xff] %v2262
        %2327 = vst [vmem:[%s260 + $0x178] sm:$0xff] %v2263
        %2328 = vst [vmem:[%s260 + $0x180] sm:$0xff] %v2264
        %2329 = vst [vmem:[%s260 + $0x188] sm:$0xff] %v2265
        %2330 = vst [vmem:[%s260 + $0x190] sm:$0xff] %v2266
        %2331 = vst [vmem:[%s260 + $0x198] sm:$0xff] %v2267
        %2332 = vst [vmem:[%s260 + $0x1a0] sm:$0xff] %v2268
        %2333 = vst [vmem:[%s260 + $0x1a8] sm:$0xff] %v2269
        %2334 = vst [vmem:[%s260 + $0x1b0] sm:$0xff] %v2270
        %2335 = vst [vmem:[%s260 + $0x1b8] sm:$0xff] %v2271
        %2336 = vst [vmem:[%s260 + $0x1c0] sm:$0xff] %v2272
        %2337 = vst [vmem:[%s260 + $0x1c8] sm:$0xff] %v2273
        %2338 = vst [vmem:[%s260 + $0x1d0] sm:$0xff] %v2274
        %2339 = vst [vmem:[%s260 + $0x1d8] sm:$0xff] %v2275
        %2340 = vst [vmem:[%s260 + $0x1e0] sm:$0xff] %v2276
        %2341 = vst [vmem:[%s260 + $0x1e8] sm:$0xff] %v2277
        %2342 = vst [vmem:[%s260 + $0x1f0] sm:$0xff] %v2278
        %2343 = vst [vmem:[%s260 + $0x1f8] sm:$0xff] %v2279
        %s2344 = sand.u32 %s156, 1
        %s2345 = scalar_lea.sflag [#allocation4], %s2344
        %s2346 = sand.u32 %s156, 1
        %s2347 = smul.addr %s2346, 512
        %s2348 = scalar_lea.vmem [#allocation5], %s2347
        // Predicated region
        $region45: #{tpu_custom_call.1} parent=39 // pred_check
          %p2349 = pneg %p166
        $region46: #{tpu_custom_call.1} parent=39 // pred_check_branch
          %2351 = sbr.rel (%p2349) target = $region48
        $region47: #{tpu_custom_call.1} parent=39 // pred_region
          %s2352 = smul.u32 16, %s27
          %s2354 = ssub.s32 8192, 8192
          %2355 = vsyncadd %s2345, %s2354
          %s2356 = smul.addr %s26, 128
          %s2357 = sadd.s32 %s2352, %s2356
          %s2358 = smul.addr %s2357, 128
          %s2359 = scalar_lea.hbm %s5, %s2358
          %s2360 = sshll.u32 %s2348, 4
          %s2361 = int_to_ptr.vmem [resolvable:$true] %s2360
          %2366 = dma.vmem_to_hbm [thread:$0]  %s2361, 8192, %s2359, %s2345, 2048, 4096, 128
        $region48: #{tpu_custom_call.1} parent=39 // pred_fallthru
          _
      $region40: #{tpu_custom_call.1} parent=5 // pred_fallthru
        _
      %p2367 = scmp.le.s32.totalorder 2, %s17
      // Predicated region
      $region49: #{tpu_custom_call.1} parent=5 // pred_check
        %p2368 = pneg %p2367
      $region50: #{tpu_custom_call.1} parent=5 // pred_check_branch
        %2370 = sbr.rel (%p2368) target = $region52
      $region51: #{tpu_custom_call.1} parent=5 // pred_region
        %s2371 = ssub.s32 %s17, 2
        // Predicated region
        $region53: #{tpu_custom_call.1} parent=51 // pred_check
          %p2372 = pneg %p172
        $region54: #{tpu_custom_call.1} parent=51 // pred_check_branch
          %2374 = sbr.rel (%p2372) target = $region56
        $region55: #{tpu_custom_call.1} parent=51 // pred_region
          %s2375 = sand.u32 %s157, 1
          %s2376 = scalar_lea.sflag [#allocation4], %s2375
          %s2377 = sand.u32 %s157, 1
          %s2378 = smul.addr %s2377, 512
          %s2379 = scalar_lea.vmem [#allocation5], %s2378
          %2380 = dma.done %s2376, 8192
        $region56: #{tpu_custom_call.1} parent=51 // pred_fallthru
          _
      $region52: #{tpu_custom_call.1} parent=5 // pred_fallthru
        _
    $region6: #{tpu_custom_call.1} parent=1 // loop_footer
      %s21 = sadd.s32 1, %s17
    $region7: #{tpu_custom_call.1} parent=1 // loop_footer_branch
      %16 = sbr.rel target = $region3
    $region8: #{tpu_custom_call.1} parent=1 // loop_exit
      _
    %2381 = vsyncpa [#allocation3], 1
    %s2382 = scalar_lea.sflag [#allocation3], 1
    %2383 = vsyncpa %s2382, 1
    %2384 = vsyncpa [#allocation4], 1
    %s2385 = scalar_lea.sflag [#allocation4], 1
    %2386 = vsyncpa %s2385, 1

</llo_original>
